<compile_context>
chip_gen: v7x
topology: tpu7x:2x2x1
jax: 0.10.0
libtpu: 0.0.40
codegen_flags: <defaults>
</compile_context>

<pallas_src>
import functools

import numpy as np
import jax
import jax.numpy as jnp
from jax.experimental import pallas as pl
from jax.experimental.pallas import tpu as pltpu

_BN_EPS = 1e-5


def _conv3x3_lane_dense(h, w_flat, b_col, masks, wp):
    """3x3 conv (pad=1) + bias + ReLU on a lane-dense activation slab.

    h      : (c_in, P)  activations, P = n*hp*wp flattened onto lanes
    w_flat : (c_out, 9*c_in)  column index = (dy*3+dx)*c_in + ci  (BN folded)
    b_col  : (c_out, 1)       bias (BN folded)
    masks  : (9, P)           per-tap validity mask (zero where the shifted
                              pixel is outside its image)
    Returns (c_out, P) float32.
    """
    c_in, p_len = h.shape
    c_out = w_flat.shape[0]
    acc = jnp.zeros((c_out, p_len), dtype=jnp.float32)
    for dy in range(3):
        for dx in range(3):
            t = dy * 3 + dx
            s = (dy - 1) * wp + (dx - 1)
            if s == 0:
                shifted = h                      # centre tap: no shift needed
            else:
                # out[p] needs in[p + s]; mask kills wrapped/out-of-image lanes
                shifted = jnp.roll(h, -s, axis=1) * masks[t:t + 1, :]
            for ci in range(c_in):
                idx = t * c_in + ci
                wcol = w_flat[:, idx:idx + 1]           # (c_out, 1)
                acc = acc + wcol * shifted[ci:ci + 1, :]  # (c_out, P) VPU FMA
    return jnp.maximum(acc + b_col, 0.0)


def _down_kernel(x_ref, w1_ref, b1_ref, w2_ref, b2_ref, mask_ref, o_ref, *, wp):
    masks = mask_ref[...]                                 # (9, P)
    h1 = _conv3x3_lane_dense(x_ref[...], w1_ref[...], b1_ref[...], masks, wp)
    # conv1 output stays in vregs -> feeds conv2 directly (no VMEM round trip)
    o_ref[...] = _conv3x3_lane_dense(h1, w2_ref[...], b2_ref[...], masks, wp)


def _make_masks(n, hp, wp):
    """(9, n*hp*wp) float32 validity masks for the 9 conv taps."""
    p = np.arange(n * hp * wp)
    q = p % (hp * wp)
    y = q // wp
    x = q % wp
    masks = np.zeros((9, n * hp * wp), dtype=np.float32)
    for dy in range(3):
        for dx in range(3):
            ok = ((y + dy - 1 >= 0) & (y + dy - 1 < hp) &
                  (x + dx - 1 >= 0) & (x + dx - 1 < wp))
            masks[dy * 3 + dx] = ok.astype(np.float32)
    return masks


def _fold_bn(w, b, gamma, beta, mean, var, eps):
    """Fold eval-mode BatchNorm2d into the preceding conv's weight/bias."""
    scale = gamma / jnp.sqrt(var + eps)                   # (c_out,)
    w_f = w * scale[:, None, None, None]                  # (c_out,c_in,3,3)
    b_f = (b - mean) * scale + beta                       # (c_out,)
    return w_f, b_f


@jax.jit
def down_forward(x, w1, b1, g1, be1, m1, v1, w2, b2, g2, be2, m2, v2):
    """Down.forward(x): MaxPool2d(2) then DoubleConv (eval-mode BN)."""
    n, c_in, h, w = x.shape
    c_out = w1.shape[0]
    assert h % 2 == 0 and w % 2 == 0, "MaxPool2d(2) needs even spatial dims"
    hp, wp = h // 2, w // 2
    p_len = n * hp * wp

    # nn.MaxPool2d(2): contiguous reshape + max. Fuses with the lane-dense
    # layout transform below into a single tiny XLA producer.
    x_pooled = jnp.max(x.reshape(n, c_in, hp, 2, wp, 2), axis=(3, 5))

    # Lane-dense layout: channels on sublanes, n*hp*wp (=128 here) on lanes.
    x_flat = jnp.transpose(x_pooled, (1, 0, 2, 3)).reshape(c_in, p_len)

    # Fold BN into the convs; reorder weights so columns are tap-major.
    w1f, b1f = _fold_bn(w1, b1, g1, be1, m1, v1, _BN_EPS)
    w2f, b2f = _fold_bn(w2, b2, g2, be2, m2, v2, _BN_EPS)
    w1_flat = jnp.transpose(w1f, (0, 2, 3, 1)).reshape(c_out, 9 * c_in)
    w2_flat = jnp.transpose(w2f, (0, 2, 3, 1)).reshape(c_out, 9 * c_out)
    b1_col = b1f.reshape(c_out, 1)
    b2_col = b2f.reshape(c_out, 1)

    masks = jnp.asarray(_make_masks(n, hp, wp))           # (9, P) constant

    kernel = functools.partial(_down_kernel, wp=wp)
    vmem = lambda: pl.BlockSpec(memory_space=pltpu.MemorySpace.VMEM)

    # No grid: the whole batch is one block (a few KiB), so there is exactly
    # one kernel invocation and zero per-step pipeline overhead.
    out_flat = pl.pallas_call(
        kernel,
        out_shape=jax.ShapeDtypeStruct((c_out, p_len), jnp.float32),
        in_specs=[vmem() for _ in range(6)],
        out_specs=vmem(),
    )(x_flat, w1_flat, b1_col, w2_flat, b2_col, masks)

    # Back to NCHW.
    return jnp.transpose(out_flat.reshape(c_out, n, hp, wp), (1, 0, 2, 3))


if __name__ == "__main__":
    # Module config: Down(in_channels=4, out_channels=8); x: (2, 4, 16, 16).
    in_channels, out_channels = 4, 8
    batch, spatial = 2, 16

    key = jax.random.PRNGKey(0)
    keys = jax.random.split(key, 13)

    x = jax.random.normal(keys[0], (batch, in_channels, spatial, spatial),
                          dtype=jnp.float32)

    def conv_init(kw, kb, co, ci, ksz):
        fan_in = ci * ksz * ksz
        bound = 1.0 / (fan_in ** 0.5)
        wgt = jax.random.uniform(kw, (co, ci, ksz, ksz),
                                 minval=-bound, maxval=bound, dtype=jnp.float32)
        bia = jax.random.uniform(kb, (co,),
                                 minval=-bound, maxval=bound, dtype=jnp.float32)
        return wgt, bia

    w1, b1 = conv_init(keys[1], keys[2], out_channels, in_channels, 3)
    w2, b2 = conv_init(keys[3], keys[4], out_channels, out_channels, 3)

    # BatchNorm2d params / running statistics (eval-mode semantics).
    g1 = jax.random.uniform(keys[5], (out_channels,), minval=0.5, maxval=1.5,
                            dtype=jnp.float32)
    be1 = 0.1 * jax.random.normal(keys[6], (out_channels,), dtype=jnp.float32)
    m1 = 0.1 * jax.random.normal(keys[7], (out_channels,), dtype=jnp.float32)
    v1 = jax.random.uniform(keys[8], (out_channels,), minval=0.5, maxval=1.5,
                            dtype=jnp.float32)
    g2 = jax.random.uniform(keys[9], (out_channels,), minval=0.5, maxval=1.5,
                            dtype=jnp.float32)
    be2 = 0.1 * jax.random.normal(keys[10], (out_channels,), dtype=jnp.float32)
    m2 = 0.1 * jax.random.normal(keys[11], (out_channels,), dtype=jnp.float32)
    v2 = jax.random.uniform(keys[12], (out_channels,), minval=0.5, maxval=1.5,
                            dtype=jnp.float32)

    y = down_forward(x, w1, b1, g1, be1, m1, v1, w2, b2, g2, be2, m2, v2)
    y = jax.block_until_ready(y)

    # Plain-JAX reference of the torch module (MaxPool2d -> conv/BN/ReLU x2).
    def reference(x):
        pooled = jax.lax.reduce_window(
            x, jnp.array(-jnp.inf, x.dtype), jax.lax.max,
            window_dimensions=(1, 1, 2, 2), window_strides=(1, 1, 2, 2),
            padding="VALID")

        def conv_bn_relu(hh, wgt, bia, g, be, m, v):
            z = jax.lax.conv_general_dilated(
                hh, wgt, window_strides=(1, 1), padding="SAME",
                dimension_numbers=("NCHW", "OIHW", "NCHW"),
                precision=jax.lax.Precision.HIGHEST)
            z = z + bia[None, :, None, None]
            z = (z - m[None, :, None, None]) / jnp.sqrt(
                v[None, :, None, None] + _BN_EPS)
            z = z * g[None, :, None, None] + be[None, :, None, None]
            return jnp.maximum(z, 0.0)

        h1 = conv_bn_relu(pooled, w1, b1, g1, be1, m1, v1)
        return conv_bn_relu(h1, w2, b2, g2, be2, m2, v2)

    y_ref = reference(x)
    assert y.shape == (batch, out_channels, spatial // 2, spatial // 2)
    max_err = float(jnp.max(jnp.abs(y - y_ref)))
    assert jnp.allclose(y, y_ref, atol=2e-4, rtol=2e-4), max_err

    print("KERNEL_OK")
</pallas_src>

<mosaic_0001>
module attributes {stable_mosaic.version = 11 : i64} {
  func.func @_down_kernel(%arg0: memref<4x128xf32, #tpu.memory_space<vmem>>, %arg1: memref<8x36xf32, #tpu.memory_space<vmem>>, %arg2: memref<8x1xf32, #tpu.memory_space<vmem>>, %arg3: memref<8x72xf32, #tpu.memory_space<vmem>>, %arg4: memref<8x1xf32, #tpu.memory_space<vmem>>, %arg5: memref<9x128xf32, #tpu.memory_space<vmem>>, %arg6: memref<8x128xf32, #tpu.memory_space<vmem>>) attributes {dimension_semantics = [], scalar_prefetch = 0 : i64, scratch_operands = 0 : i64, tpu.core_type = #tpu.core_type<tc>} {
    %c0 = arith.constant 0 : index
    %c0_0 = arith.constant 0 : index
    %0 = vector.load %arg5[%c0, %c0_0] : memref<9x128xf32, #tpu.memory_space<vmem>>, vector<9x128xf32>
    %c0_1 = arith.constant 0 : index
    %c0_2 = arith.constant 0 : index
    %1 = vector.load %arg0[%c0_1, %c0_2] : memref<4x128xf32, #tpu.memory_space<vmem>>, vector<4x128xf32>
    %c0_3 = arith.constant 0 : index
    %c0_4 = arith.constant 0 : index
    %2 = vector.load %arg1[%c0_3, %c0_4] : memref<8x36xf32, #tpu.memory_space<vmem>>, vector<8x36xf32>
    %c0_5 = arith.constant 0 : index
    %c0_6 = arith.constant 0 : index
    %3 = vector.load %arg2[%c0_5, %c0_6] : memref<8x1xf32, #tpu.memory_space<vmem>>, vector<8x1xf32>
    %cst = arith.constant 0.000000e+00 : f32
    %4 = vector.broadcast %cst : f32 to vector<8x128xf32>
    %5 = vector.extract_strided_slice %1 {offsets = [0, 119], sizes = [4, 9], strides = [1, 1]} : vector<4x128xf32> to vector<4x9xf32>
    %6 = vector.extract_strided_slice %1 {offsets = [0, 0], sizes = [4, 119], strides = [1, 1]} : vector<4x128xf32> to vector<4x119xf32>
    %7 = tpu.concatenate %5, %6 in 1 : vector<4x9xf32>, vector<4x119xf32> -> vector<4x128xf32>
    %8 = vector.extract_strided_slice %0 {offsets = [0, 0], sizes = [1, 128], strides = [1, 1]} : vector<9x128xf32> to vector<1x128xf32>
    %9 = vector.broadcast %8 : vector<1x128xf32> to vector<4x128xf32>
    %10 = arith.mulf %7, %9 : vector<4x128xf32>
    %11 = vector.extract_strided_slice %2 {offsets = [0, 0], sizes = [8, 1], strides = [1, 1]} : vector<8x36xf32> to vector<8x1xf32>
    %12 = vector.extract_strided_slice %10 {offsets = [0, 0], sizes = [1, 128], strides = [1, 1]} : vector<4x128xf32> to vector<1x128xf32>
    %13 = vector.broadcast %11 : vector<8x1xf32> to vector<8x128xf32>
    %14 = vector.broadcast %12 : vector<1x128xf32> to vector<8x128xf32>
    %15 = arith.mulf %13, %14 : vector<8x128xf32>
    %16 = arith.addf %4, %15 : vector<8x128xf32>
    %17 = vector.extract_strided_slice %2 {offsets = [0, 1], sizes = [8, 1], strides = [1, 1]} : vector<8x36xf32> to vector<8x1xf32>
    %18 = vector.extract_strided_slice %10 {offsets = [1, 0], sizes = [1, 128], strides = [1, 1]} : vector<4x128xf32> to vector<1x128xf32>
    %19 = vector.broadcast %17 : vector<8x1xf32> to vector<8x128xf32>
    %20 = vector.broadcast %18 : vector<1x128xf32> to vector<8x128xf32>
    %21 = arith.mulf %19, %20 : vector<8x128xf32>
    %22 = arith.addf %16, %21 : vector<8x128xf32>
    %23 = vector.extract_strided_slice %2 {offsets = [0, 2], sizes = [8, 1], strides = [1, 1]} : vector<8x36xf32> to vector<8x1xf32>
    %24 = vector.extract_strided_slice %10 {offsets = [2, 0], sizes = [1, 128], strides = [1, 1]} : vector<4x128xf32> to vector<1x128xf32>
    %25 = vector.broadcast %23 : vector<8x1xf32> to vector<8x128xf32>
    %26 = vector.broadcast %24 : vector<1x128xf32> to vector<8x128xf32>
    %27 = arith.mulf %25, %26 : vector<8x128xf32>
    %28 = arith.addf %22, %27 : vector<8x128xf32>
    %29 = vector.extract_strided_slice %2 {offsets = [0, 3], sizes = [8, 1], strides = [1, 1]} : vector<8x36xf32> to vector<8x1xf32>
    %30 = vector.extract_strided_slice %10 {offsets = [3, 0], sizes = [1, 128], strides = [1, 1]} : vector<4x128xf32> to vector<1x128xf32>
    %31 = vector.broadcast %29 : vector<8x1xf32> to vector<8x128xf32>
    %32 = vector.broadcast %30 : vector<1x128xf32> to vector<8x128xf32>
    %33 = arith.mulf %31, %32 : vector<8x128xf32>
    %34 = arith.addf %28, %33 : vector<8x128xf32>
    %35 = vector.extract_strided_slice %1 {offsets = [0, 120], sizes = [4, 8], strides = [1, 1]} : vector<4x128xf32> to vector<4x8xf32>
    %36 = vector.extract_strided_slice %1 {offsets = [0, 0], sizes = [4, 120], strides = [1, 1]} : vector<4x128xf32> to vector<4x120xf32>
    %37 = tpu.concatenate %35, %36 in 1 : vector<4x8xf32>, vector<4x120xf32> -> vector<4x128xf32>
    %38 = vector.extract_strided_slice %0 {offsets = [1, 0], sizes = [1, 128], strides = [1, 1]} : vector<9x128xf32> to vector<1x128xf32>
    %39 = vector.broadcast %38 : vector<1x128xf32> to vector<4x128xf32>
    %40 = arith.mulf %37, %39 : vector<4x128xf32>
    %41 = vector.extract_strided_slice %2 {offsets = [0, 4], sizes = [8, 1], strides = [1, 1]} : vector<8x36xf32> to vector<8x1xf32>
    %42 = vector.extract_strided_slice %40 {offsets = [0, 0], sizes = [1, 128], strides = [1, 1]} : vector<4x128xf32> to vector<1x128xf32>
    %43 = vector.broadcast %41 : vector<8x1xf32> to vector<8x128xf32>
    %44 = vector.broadcast %42 : vector<1x128xf32> to vector<8x128xf32>
    %45 = arith.mulf %43, %44 : vector<8x128xf32>
    %46 = arith.addf %34, %45 : vector<8x128xf32>
    %47 = vector.extract_strided_slice %2 {offsets = [0, 5], sizes = [8, 1], strides = [1, 1]} : vector<8x36xf32> to vector<8x1xf32>
    %48 = vector.extract_strided_slice %40 {offsets = [1, 0], sizes = [1, 128], strides = [1, 1]} : vector<4x128xf32> to vector<1x128xf32>
    %49 = vector.broadcast %47 : vector<8x1xf32> to vector<8x128xf32>
    %50 = vector.broadcast %48 : vector<1x128xf32> to vector<8x128xf32>
    %51 = arith.mulf %49, %50 : vector<8x128xf32>
    %52 = arith.addf %46, %51 : vector<8x128xf32>
    %53 = vector.extract_strided_slice %2 {offsets = [0, 6], sizes = [8, 1], strides = [1, 1]} : vector<8x36xf32> to vector<8x1xf32>
    %54 = vector.extract_strided_slice %40 {offsets = [2, 0], sizes = [1, 128], strides = [1, 1]} : vector<4x128xf32> to vector<1x128xf32>
    %55 = vector.broadcast %53 : vector<8x1xf32> to vector<8x128xf32>
    %56 = vector.broadcast %54 : vector<1x128xf32> to vector<8x128xf32>
    %57 = arith.mulf %55, %56 : vector<8x128xf32>
    %58 = arith.addf %52, %57 : vector<8x128xf32>
    %59 = vector.extract_strided_slice %2 {offsets = [0, 7], sizes = [8, 1], strides = [1, 1]} : vector<8x36xf32> to vector<8x1xf32>
    %60 = vector.extract_strided_slice %40 {offsets = [3, 0], sizes = [1, 128], strides = [1, 1]} : vector<4x128xf32> to vector<1x128xf32>
    %61 = vector.broadcast %59 : vector<8x1xf32> to vector<8x128xf32>
    %62 = vector.broadcast %60 : vector<1x128xf32> to vector<8x128xf32>
    %63 = arith.mulf %61, %62 : vector<8x128xf32>
    %64 = arith.addf %58, %63 : vector<8x128xf32>
    %65 = vector.extract_strided_slice %1 {offsets = [0, 121], sizes = [4, 7], strides = [1, 1]} : vector<4x128xf32> to vector<4x7xf32>
    %66 = vector.extract_strided_slice %1 {offsets = [0, 0], sizes = [4, 121], strides = [1, 1]} : vector<4x128xf32> to vector<4x121xf32>
    %67 = tpu.concatenate %65, %66 in 1 : vector<4x7xf32>, vector<4x121xf32> -> vector<4x128xf32>
    %68 = vector.extract_strided_slice %0 {offsets = [2, 0], sizes = [1, 128], strides = [1, 1]} : vector<9x128xf32> to vector<1x128xf32>
    %69 = vector.broadcast %68 : vector<1x128xf32> to vector<4x128xf32>
    %70 = arith.mulf %67, %69 : vector<4x128xf32>
    %71 = vector.extract_strided_slice %2 {offsets = [0, 8], sizes = [8, 1], strides = [1, 1]} : vector<8x36xf32> to vector<8x1xf32>
    %72 = vector.extract_strided_slice %70 {offsets = [0, 0], sizes = [1, 128], strides = [1, 1]} : vector<4x128xf32> to vector<1x128xf32>
    %73 = vector.broadcast %71 : vector<8x1xf32> to vector<8x128xf32>
    %74 = vector.broadcast %72 : vector<1x128xf32> to vector<8x128xf32>
    %75 = arith.mulf %73, %74 : vector<8x128xf32>
    %76 = arith.addf %64, %75 : vector<8x128xf32>
    %77 = vector.extract_strided_slice %2 {offsets = [0, 9], sizes = [8, 1], strides = [1, 1]} : vector<8x36xf32> to vector<8x1xf32>
    %78 = vector.extract_strided_slice %70 {offsets = [1, 0], sizes = [1, 128], strides = [1, 1]} : vector<4x128xf32> to vector<1x128xf32>
    %79 = vector.broadcast %77 : vector<8x1xf32> to vector<8x128xf32>
    %80 = vector.broadcast %78 : vector<1x128xf32> to vector<8x128xf32>
    %81 = arith.mulf %79, %80 : vector<8x128xf32>
    %82 = arith.addf %76, %81 : vector<8x128xf32>
    %83 = vector.extract_strided_slice %2 {offsets = [0, 10], sizes = [8, 1], strides = [1, 1]} : vector<8x36xf32> to vector<8x1xf32>
    %84 = vector.extract_strided_slice %70 {offsets = [2, 0], sizes = [1, 128], strides = [1, 1]} : vector<4x128xf32> to vector<1x128xf32>
    %85 = vector.broadcast %83 : vector<8x1xf32> to vector<8x128xf32>
    %86 = vector.broadcast %84 : vector<1x128xf32> to vector<8x128xf32>
    %87 = arith.mulf %85, %86 : vector<8x128xf32>
    %88 = arith.addf %82, %87 : vector<8x128xf32>
    %89 = vector.extract_strided_slice %2 {offsets = [0, 11], sizes = [8, 1], strides = [1, 1]} : vector<8x36xf32> to vector<8x1xf32>
    %90 = vector.extract_strided_slice %70 {offsets = [3, 0], sizes = [1, 128], strides = [1, 1]} : vector<4x128xf32> to vector<1x128xf32>
    %91 = vector.broadcast %89 : vector<8x1xf32> to vector<8x128xf32>
    %92 = vector.broadcast %90 : vector<1x128xf32> to vector<8x128xf32>
    %93 = arith.mulf %91, %92 : vector<8x128xf32>
    %94 = arith.addf %88, %93 : vector<8x128xf32>
    %95 = vector.extract_strided_slice %1 {offsets = [0, 127], sizes = [4, 1], strides = [1, 1]} : vector<4x128xf32> to vector<4x1xf32>
    %96 = vector.extract_strided_slice %1 {offsets = [0, 0], sizes = [4, 127], strides = [1, 1]} : vector<4x128xf32> to vector<4x127xf32>
    %97 = tpu.concatenate %95, %96 in 1 : vector<4x1xf32>, vector<4x127xf32> -> vector<4x128xf32>
    %98 = vector.extract_strided_slice %0 {offsets = [3, 0], sizes = [1, 128], strides = [1, 1]} : vector<9x128xf32> to vector<1x128xf32>
    %99 = vector.broadcast %98 : vector<1x128xf32> to vector<4x128xf32>
    %100 = arith.mulf %97, %99 : vector<4x128xf32>
    %101 = vector.extract_strided_slice %2 {offsets = [0, 12], sizes = [8, 1], strides = [1, 1]} : vector<8x36xf32> to vector<8x1xf32>
    %102 = vector.extract_strided_slice %100 {offsets = [0, 0], sizes = [1, 128], strides = [1, 1]} : vector<4x128xf32> to vector<1x128xf32>
    %103 = vector.broadcast %101 : vector<8x1xf32> to vector<8x128xf32>
    %104 = vector.broadcast %102 : vector<1x128xf32> to vector<8x128xf32>
    %105 = arith.mulf %103, %104 : vector<8x128xf32>
    %106 = arith.addf %94, %105 : vector<8x128xf32>
    %107 = vector.extract_strided_slice %2 {offsets = [0, 13], sizes = [8, 1], strides = [1, 1]} : vector<8x36xf32> to vector<8x1xf32>
    %108 = vector.extract_strided_slice %100 {offsets = [1, 0], sizes = [1, 128], strides = [1, 1]} : vector<4x128xf32> to vector<1x128xf32>
    %109 = vector.broadcast %107 : vector<8x1xf32> to vector<8x128xf32>
    %110 = vector.broadcast %108 : vector<1x128xf32> to vector<8x128xf32>
    %111 = arith.mulf %109, %110 : vector<8x128xf32>
    %112 = arith.addf %106, %111 : vector<8x128xf32>
    %113 = vector.extract_strided_slice %2 {offsets = [0, 14], sizes = [8, 1], strides = [1, 1]} : vector<8x36xf32> to vector<8x1xf32>
    %114 = vector.extract_strided_slice %100 {offsets = [2, 0], sizes = [1, 128], strides = [1, 1]} : vector<4x128xf32> to vector<1x128xf32>
    %115 = vector.broadcast %113 : vector<8x1xf32> to vector<8x128xf32>
    %116 = vector.broadcast %114 : vector<1x128xf32> to vector<8x128xf32>
    %117 = arith.mulf %115, %116 : vector<8x128xf32>
    %118 = arith.addf %112, %117 : vector<8x128xf32>
    %119 = vector.extract_strided_slice %2 {offsets = [0, 15], sizes = [8, 1], strides = [1, 1]} : vector<8x36xf32> to vector<8x1xf32>
    %120 = vector.extract_strided_slice %100 {offsets = [3, 0], sizes = [1, 128], strides = [1, 1]} : vector<4x128xf32> to vector<1x128xf32>
    %121 = vector.broadcast %119 : vector<8x1xf32> to vector<8x128xf32>
    %122 = vector.broadcast %120 : vector<1x128xf32> to vector<8x128xf32>
    %123 = arith.mulf %121, %122 : vector<8x128xf32>
    %124 = arith.addf %118, %123 : vector<8x128xf32>
    %125 = vector.extract_strided_slice %2 {offsets = [0, 16], sizes = [8, 1], strides = [1, 1]} : vector<8x36xf32> to vector<8x1xf32>
    %126 = vector.extract_strided_slice %1 {offsets = [0, 0], sizes = [1, 128], strides = [1, 1]} : vector<4x128xf32> to vector<1x128xf32>
    %127 = vector.broadcast %125 : vector<8x1xf32> to vector<8x128xf32>
    %128 = vector.broadcast %126 : vector<1x128xf32> to vector<8x128xf32>
    %129 = arith.mulf %127, %128 : vector<8x128xf32>
    %130 = arith.addf %124, %129 : vector<8x128xf32>
    %131 = vector.extract_strided_slice %2 {offsets = [0, 17], sizes = [8, 1], strides = [1, 1]} : vector<8x36xf32> to vector<8x1xf32>
    %132 = vector.extract_strided_slice %1 {offsets = [1, 0], sizes = [1, 128], strides = [1, 1]} : vector<4x128xf32> to vector<1x128xf32>
    %133 = vector.broadcast %131 : vector<8x1xf32> to vector<8x128xf32>
    %134 = vector.broadcast %132 : vector<1x128xf32> to vector<8x128xf32>
    %135 = arith.mulf %133, %134 : vector<8x128xf32>
    %136 = arith.addf %130, %135 : vector<8x128xf32>
    %137 = vector.extract_strided_slice %2 {offsets = [0, 18], sizes = [8, 1], strides = [1, 1]} : vector<8x36xf32> to vector<8x1xf32>
    %138 = vector.extract_strided_slice %1 {offsets = [2, 0], sizes = [1, 128], strides = [1, 1]} : vector<4x128xf32> to vector<1x128xf32>
    %139 = vector.broadcast %137 : vector<8x1xf32> to vector<8x128xf32>
    %140 = vector.broadcast %138 : vector<1x128xf32> to vector<8x128xf32>
    %141 = arith.mulf %139, %140 : vector<8x128xf32>
    %142 = arith.addf %136, %141 : vector<8x128xf32>
    %143 = vector.extract_strided_slice %2 {offsets = [0, 19], sizes = [8, 1], strides = [1, 1]} : vector<8x36xf32> to vector<8x1xf32>
    %144 = vector.extract_strided_slice %1 {offsets = [3, 0], sizes = [1, 128], strides = [1, 1]} : vector<4x128xf32> to vector<1x128xf32>
    %145 = vector.broadcast %143 : vector<8x1xf32> to vector<8x128xf32>
    %146 = vector.broadcast %144 : vector<1x128xf32> to vector<8x128xf32>
    %147 = arith.mulf %145, %146 : vector<8x128xf32>
    %148 = arith.addf %142, %147 : vector<8x128xf32>
    %149 = vector.extract_strided_slice %1 {offsets = [0, 1], sizes = [4, 127], strides = [1, 1]} : vector<4x128xf32> to vector<4x127xf32>
    %150 = vector.extract_strided_slice %1 {offsets = [0, 0], sizes = [4, 1], strides = [1, 1]} : vector<4x128xf32> to vector<4x1xf32>
    %151 = tpu.concatenate %149, %150 in 1 : vector<4x127xf32>, vector<4x1xf32> -> vector<4x128xf32>
    %152 = vector.extract_strided_slice %0 {offsets = [5, 0], sizes = [1, 128], strides = [1, 1]} : vector<9x128xf32> to vector<1x128xf32>
    %153 = vector.broadcast %152 : vector<1x128xf32> to vector<4x128xf32>
    %154 = arith.mulf %151, %153 : vector<4x128xf32>
    %155 = vector.extract_strided_slice %2 {offsets = [0, 20], sizes = [8, 1], strides = [1, 1]} : vector<8x36xf32> to vector<8x1xf32>
    %156 = vector.extract_strided_slice %154 {offsets = [0, 0], sizes = [1, 128], strides = [1, 1]} : vector<4x128xf32> to vector<1x128xf32>
    %157 = vector.broadcast %155 : vector<8x1xf32> to vector<8x128xf32>
    %158 = vector.broadcast %156 : vector<1x128xf32> to vector<8x128xf32>
    %159 = arith.mulf %157, %158 : vector<8x128xf32>
    %160 = arith.addf %148, %159 : vector<8x128xf32>
    %161 = vector.extract_strided_slice %2 {offsets = [0, 21], sizes = [8, 1], strides = [1, 1]} : vector<8x36xf32> to vector<8x1xf32>
    %162 = vector.extract_strided_slice %154 {offsets = [1, 0], sizes = [1, 128], strides = [1, 1]} : vector<4x128xf32> to vector<1x128xf32>
    %163 = vector.broadcast %161 : vector<8x1xf32> to vector<8x128xf32>
    %164 = vector.broadcast %162 : vector<1x128xf32> to vector<8x128xf32>
    %165 = arith.mulf %163, %164 : vector<8x128xf32>
    %166 = arith.addf %160, %165 : vector<8x128xf32>
    %167 = vector.extract_strided_slice %2 {offsets = [0, 22], sizes = [8, 1], strides = [1, 1]} : vector<8x36xf32> to vector<8x1xf32>
    %168 = vector.extract_strided_slice %154 {offsets = [2, 0], sizes = [1, 128], strides = [1, 1]} : vector<4x128xf32> to vector<1x128xf32>
    %169 = vector.broadcast %167 : vector<8x1xf32> to vector<8x128xf32>
    %170 = vector.broadcast %168 : vector<1x128xf32> to vector<8x128xf32>
    %171 = arith.mulf %169, %170 : vector<8x128xf32>
    %172 = arith.addf %166, %171 : vector<8x128xf32>
    %173 = vector.extract_strided_slice %2 {offsets = [0, 23], sizes = [8, 1], strides = [1, 1]} : vector<8x36xf32> to vector<8x1xf32>
    %174 = vector.extract_strided_slice %154 {offsets = [3, 0], sizes = [1, 128], strides = [1, 1]} : vector<4x128xf32> to vector<1x128xf32>
    %175 = vector.broadcast %173 : vector<8x1xf32> to vector<8x128xf32>
    %176 = vector.broadcast %174 : vector<1x128xf32> to vector<8x128xf32>
    %177 = arith.mulf %175, %176 : vector<8x128xf32>
    %178 = arith.addf %172, %177 : vector<8x128xf32>
    %179 = vector.extract_strided_slice %1 {offsets = [0, 7], sizes = [4, 121], strides = [1, 1]} : vector<4x128xf32> to vector<4x121xf32>
    %180 = vector.extract_strided_slice %1 {offsets = [0, 0], sizes = [4, 7], strides = [1, 1]} : vector<4x128xf32> to vector<4x7xf32>
    %181 = tpu.concatenate %179, %180 in 1 : vector<4x121xf32>, vector<4x7xf32> -> vector<4x128xf32>
    %182 = vector.extract_strided_slice %0 {offsets = [6, 0], sizes = [1, 128], strides = [1, 1]} : vector<9x128xf32> to vector<1x128xf32>
    %183 = vector.broadcast %182 : vector<1x128xf32> to vector<4x128xf32>
    %184 = arith.mulf %181, %183 : vector<4x128xf32>
    %185 = vector.extract_strided_slice %2 {offsets = [0, 24], sizes = [8, 1], strides = [1, 1]} : vector<8x36xf32> to vector<8x1xf32>
    %186 = vector.extract_strided_slice %184 {offsets = [0, 0], sizes = [1, 128], strides = [1, 1]} : vector<4x128xf32> to vector<1x128xf32>
    %187 = vector.broadcast %185 : vector<8x1xf32> to vector<8x128xf32>
    %188 = vector.broadcast %186 : vector<1x128xf32> to vector<8x128xf32>
    %189 = arith.mulf %187, %188 : vector<8x128xf32>
    %190 = arith.addf %178, %189 : vector<8x128xf32>
    %191 = vector.extract_strided_slice %2 {offsets = [0, 25], sizes = [8, 1], strides = [1, 1]} : vector<8x36xf32> to vector<8x1xf32>
    %192 = vector.extract_strided_slice %184 {offsets = [1, 0], sizes = [1, 128], strides = [1, 1]} : vector<4x128xf32> to vector<1x128xf32>
    %193 = vector.broadcast %191 : vector<8x1xf32> to vector<8x128xf32>
    %194 = vector.broadcast %192 : vector<1x128xf32> to vector<8x128xf32>
    %195 = arith.mulf %193, %194 : vector<8x128xf32>
    %196 = arith.addf %190, %195 : vector<8x128xf32>
    %197 = vector.extract_strided_slice %2 {offsets = [0, 26], sizes = [8, 1], strides = [1, 1]} : vector<8x36xf32> to vector<8x1xf32>
    %198 = vector.extract_strided_slice %184 {offsets = [2, 0], sizes = [1, 128], strides = [1, 1]} : vector<4x128xf32> to vector<1x128xf32>
    %199 = vector.broadcast %197 : vector<8x1xf32> to vector<8x128xf32>
    %200 = vector.broadcast %198 : vector<1x128xf32> to vector<8x128xf32>
    %201 = arith.mulf %199, %200 : vector<8x128xf32>
    %202 = arith.addf %196, %201 : vector<8x128xf32>
    %203 = vector.extract_strided_slice %2 {offsets = [0, 27], sizes = [8, 1], strides = [1, 1]} : vector<8x36xf32> to vector<8x1xf32>
    %204 = vector.extract_strided_slice %184 {offsets = [3, 0], sizes = [1, 128], strides = [1, 1]} : vector<4x128xf32> to vector<1x128xf32>
    %205 = vector.broadcast %203 : vector<8x1xf32> to vector<8x128xf32>
    %206 = vector.broadcast %204 : vector<1x128xf32> to vector<8x128xf32>
    %207 = arith.mulf %205, %206 : vector<8x128xf32>
    %208 = arith.addf %202, %207 : vector<8x128xf32>
    %209 = vector.extract_strided_slice %1 {offsets = [0, 8], sizes = [4, 120], strides = [1, 1]} : vector<4x128xf32> to vector<4x120xf32>
    %210 = vector.extract_strided_slice %1 {offsets = [0, 0], sizes = [4, 8], strides = [1, 1]} : vector<4x128xf32> to vector<4x8xf32>
    %211 = tpu.concatenate %209, %210 in 1 : vector<4x120xf32>, vector<4x8xf32> -> vector<4x128xf32>
    %212 = vector.extract_strided_slice %0 {offsets = [7, 0], sizes = [1, 128], strides = [1, 1]} : vector<9x128xf32> to vector<1x128xf32>
    %213 = vector.broadcast %212 : vector<1x128xf32> to vector<4x128xf32>
    %214 = arith.mulf %211, %213 : vector<4x128xf32>
    %215 = vector.extract_strided_slice %2 {offsets = [0, 28], sizes = [8, 1], strides = [1, 1]} : vector<8x36xf32> to vector<8x1xf32>
    %216 = vector.extract_strided_slice %214 {offsets = [0, 0], sizes = [1, 128], strides = [1, 1]} : vector<4x128xf32> to vector<1x128xf32>
    %217 = vector.broadcast %215 : vector<8x1xf32> to vector<8x128xf32>
    %218 = vector.broadcast %216 : vector<1x128xf32> to vector<8x128xf32>
    %219 = arith.mulf %217, %218 : vector<8x128xf32>
    %220 = arith.addf %208, %219 : vector<8x128xf32>
    %221 = vector.extract_strided_slice %2 {offsets = [0, 29], sizes = [8, 1], strides = [1, 1]} : vector<8x36xf32> to vector<8x1xf32>
    %222 = vector.extract_strided_slice %214 {offsets = [1, 0], sizes = [1, 128], strides = [1, 1]} : vector<4x128xf32> to vector<1x128xf32>
    %223 = vector.broadcast %221 : vector<8x1xf32> to vector<8x128xf32>
    %224 = vector.broadcast %222 : vector<1x128xf32> to vector<8x128xf32>
    %225 = arith.mulf %223, %224 : vector<8x128xf32>
    %226 = arith.addf %220, %225 : vector<8x128xf32>
    %227 = vector.extract_strided_slice %2 {offsets = [0, 30], sizes = [8, 1], strides = [1, 1]} : vector<8x36xf32> to vector<8x1xf32>
    %228 = vector.extract_strided_slice %214 {offsets = [2, 0], sizes = [1, 128], strides = [1, 1]} : vector<4x128xf32> to vector<1x128xf32>
    %229 = vector.broadcast %227 : vector<8x1xf32> to vector<8x128xf32>
    %230 = vector.broadcast %228 : vector<1x128xf32> to vector<8x128xf32>
    %231 = arith.mulf %229, %230 : vector<8x128xf32>
    %232 = arith.addf %226, %231 : vector<8x128xf32>
    %233 = vector.extract_strided_slice %2 {offsets = [0, 31], sizes = [8, 1], strides = [1, 1]} : vector<8x36xf32> to vector<8x1xf32>
    %234 = vector.extract_strided_slice %214 {offsets = [3, 0], sizes = [1, 128], strides = [1, 1]} : vector<4x128xf32> to vector<1x128xf32>
    %235 = vector.broadcast %233 : vector<8x1xf32> to vector<8x128xf32>
    %236 = vector.broadcast %234 : vector<1x128xf32> to vector<8x128xf32>
    %237 = arith.mulf %235, %236 : vector<8x128xf32>
    %238 = arith.addf %232, %237 : vector<8x128xf32>
    %239 = vector.extract_strided_slice %1 {offsets = [0, 9], sizes = [4, 119], strides = [1, 1]} : vector<4x128xf32> to vector<4x119xf32>
    %240 = vector.extract_strided_slice %1 {offsets = [0, 0], sizes = [4, 9], strides = [1, 1]} : vector<4x128xf32> to vector<4x9xf32>
    %241 = tpu.concatenate %239, %240 in 1 : vector<4x119xf32>, vector<4x9xf32> -> vector<4x128xf32>
    %242 = vector.extract_strided_slice %0 {offsets = [8, 0], sizes = [1, 128], strides = [1, 1]} : vector<9x128xf32> to vector<1x128xf32>
    %243 = vector.broadcast %242 : vector<1x128xf32> to vector<4x128xf32>
    %244 = arith.mulf %241, %243 : vector<4x128xf32>
    %245 = vector.extract_strided_slice %2 {offsets = [0, 32], sizes = [8, 1], strides = [1, 1]} : vector<8x36xf32> to vector<8x1xf32>
    %246 = vector.extract_strided_slice %244 {offsets = [0, 0], sizes = [1, 128], strides = [1, 1]} : vector<4x128xf32> to vector<1x128xf32>
    %247 = vector.broadcast %245 : vector<8x1xf32> to vector<8x128xf32>
    %248 = vector.broadcast %246 : vector<1x128xf32> to vector<8x128xf32>
    %249 = arith.mulf %247, %248 : vector<8x128xf32>
    %250 = arith.addf %238, %249 : vector<8x128xf32>
    %251 = vector.extract_strided_slice %2 {offsets = [0, 33], sizes = [8, 1], strides = [1, 1]} : vector<8x36xf32> to vector<8x1xf32>
    %252 = vector.extract_strided_slice %244 {offsets = [1, 0], sizes = [1, 128], strides = [1, 1]} : vector<4x128xf32> to vector<1x128xf32>
    %253 = vector.broadcast %251 : vector<8x1xf32> to vector<8x128xf32>
    %254 = vector.broadcast %252 : vector<1x128xf32> to vector<8x128xf32>
    %255 = arith.mulf %253, %254 : vector<8x128xf32>
    %256 = arith.addf %250, %255 : vector<8x128xf32>
    %257 = vector.extract_strided_slice %2 {offsets = [0, 34], sizes = [8, 1], strides = [1, 1]} : vector<8x36xf32> to vector<8x1xf32>
    %258 = vector.extract_strided_slice %244 {offsets = [2, 0], sizes = [1, 128], strides = [1, 1]} : vector<4x128xf32> to vector<1x128xf32>
    %259 = vector.broadcast %257 : vector<8x1xf32> to vector<8x128xf32>
    %260 = vector.broadcast %258 : vector<1x128xf32> to vector<8x128xf32>
    %261 = arith.mulf %259, %260 : vector<8x128xf32>
    %262 = arith.addf %256, %261 : vector<8x128xf32>
    %263 = vector.extract_strided_slice %2 {offsets = [0, 35], sizes = [8, 1], strides = [1, 1]} : vector<8x36xf32> to vector<8x1xf32>
    %264 = vector.extract_strided_slice %244 {offsets = [3, 0], sizes = [1, 128], strides = [1, 1]} : vector<4x128xf32> to vector<1x128xf32>
    %265 = vector.broadcast %263 : vector<8x1xf32> to vector<8x128xf32>
    %266 = vector.broadcast %264 : vector<1x128xf32> to vector<8x128xf32>
    %267 = arith.mulf %265, %266 : vector<8x128xf32>
    %268 = arith.addf %262, %267 : vector<8x128xf32>
    %269 = vector.broadcast %3 : vector<8x1xf32> to vector<8x128xf32>
    %270 = arith.addf %268, %269 : vector<8x128xf32>
    %cst_7 = arith.constant 0.000000e+00 : f32
    %271 = vector.broadcast %cst_7 : f32 to vector<8x128xf32>
    %272 = arith.maximumf %270, %271 : vector<8x128xf32>
    %c0_8 = arith.constant 0 : index
    %c0_9 = arith.constant 0 : index
    %273 = vector.load %arg3[%c0_8, %c0_9] : memref<8x72xf32, #tpu.memory_space<vmem>>, vector<8x72xf32>
    %c0_10 = arith.constant 0 : index
    %c0_11 = arith.constant 0 : index
    %274 = vector.load %arg4[%c0_10, %c0_11] : memref<8x1xf32, #tpu.memory_space<vmem>>, vector<8x1xf32>
    %cst_12 = arith.constant 0.000000e+00 : f32
    %275 = vector.broadcast %cst_12 : f32 to vector<8x128xf32>
    %276 = vector.extract_strided_slice %272 {offsets = [0, 119], sizes = [8, 9], strides = [1, 1]} : vector<8x128xf32> to vector<8x9xf32>
    %277 = vector.extract_strided_slice %272 {offsets = [0, 0], sizes = [8, 119], strides = [1, 1]} : vector<8x128xf32> to vector<8x119xf32>
    %278 = tpu.concatenate %276, %277 in 1 : vector<8x9xf32>, vector<8x119xf32> -> vector<8x128xf32>
    %279 = vector.extract_strided_slice %0 {offsets = [0, 0], sizes = [1, 128], strides = [1, 1]} : vector<9x128xf32> to vector<1x128xf32>
    %280 = vector.broadcast %279 : vector<1x128xf32> to vector<8x128xf32>
    %281 = arith.mulf %278, %280 : vector<8x128xf32>
    %282 = vector.extract_strided_slice %273 {offsets = [0, 0], sizes = [8, 1], strides = [1, 1]} : vector<8x72xf32> to vector<8x1xf32>
    %283 = vector.extract_strided_slice %281 {offsets = [0, 0], sizes = [1, 128], strides = [1, 1]} : vector<8x128xf32> to vector<1x128xf32>
    %284 = vector.broadcast %282 : vector<8x1xf32> to vector<8x128xf32>
    %285 = vector.broadcast %283 : vector<1x128xf32> to vector<8x128xf32>
    %286 = arith.mulf %284, %285 : vector<8x128xf32>
    %287 = arith.addf %275, %286 : vector<8x128xf32>
    %288 = vector.extract_strided_slice %273 {offsets = [0, 1], sizes = [8, 1], strides = [1, 1]} : vector<8x72xf32> to vector<8x1xf32>
    %289 = vector.extract_strided_slice %281 {offsets = [1, 0], sizes = [1, 128], strides = [1, 1]} : vector<8x128xf32> to vector<1x128xf32>
    %290 = vector.broadcast %288 : vector<8x1xf32> to vector<8x128xf32>
    %291 = vector.broadcast %289 : vector<1x128xf32> to vector<8x128xf32>
    %292 = arith.mulf %290, %291 : vector<8x128xf32>
    %293 = arith.addf %287, %292 : vector<8x128xf32>
    %294 = vector.extract_strided_slice %273 {offsets = [0, 2], sizes = [8, 1], strides = [1, 1]} : vector<8x72xf32> to vector<8x1xf32>
    %295 = vector.extract_strided_slice %281 {offsets = [2, 0], sizes = [1, 128], strides = [1, 1]} : vector<8x128xf32> to vector<1x128xf32>
    %296 = vector.broadcast %294 : vector<8x1xf32> to vector<8x128xf32>
    %297 = vector.broadcast %295 : vector<1x128xf32> to vector<8x128xf32>
    %298 = arith.mulf %296, %297 : vector<8x128xf32>
    %299 = arith.addf %293, %298 : vector<8x128xf32>
    %300 = vector.extract_strided_slice %273 {offsets = [0, 3], sizes = [8, 1], strides = [1, 1]} : vector<8x72xf32> to vector<8x1xf32>
    %301 = vector.extract_strided_slice %281 {offsets = [3, 0], sizes = [1, 128], strides = [1, 1]} : vector<8x128xf32> to vector<1x128xf32>
    %302 = vector.broadcast %300 : vector<8x1xf32> to vector<8x128xf32>
    %303 = vector.broadcast %301 : vector<1x128xf32> to vector<8x128xf32>
    %304 = arith.mulf %302, %303 : vector<8x128xf32>
    %305 = arith.addf %299, %304 : vector<8x128xf32>
    %306 = vector.extract_strided_slice %273 {offsets = [0, 4], sizes = [8, 1], strides = [1, 1]} : vector<8x72xf32> to vector<8x1xf32>
    %307 = vector.extract_strided_slice %281 {offsets = [4, 0], sizes = [1, 128], strides = [1, 1]} : vector<8x128xf32> to vector<1x128xf32>
    %308 = vector.broadcast %306 : vector<8x1xf32> to vector<8x128xf32>
    %309 = vector.broadcast %307 : vector<1x128xf32> to vector<8x128xf32>
    %310 = arith.mulf %308, %309 : vector<8x128xf32>
    %311 = arith.addf %305, %310 : vector<8x128xf32>
    %312 = vector.extract_strided_slice %273 {offsets = [0, 5], sizes = [8, 1], strides = [1, 1]} : vector<8x72xf32> to vector<8x1xf32>
    %313 = vector.extract_strided_slice %281 {offsets = [5, 0], sizes = [1, 128], strides = [1, 1]} : vector<8x128xf32> to vector<1x128xf32>
    %314 = vector.broadcast %312 : vector<8x1xf32> to vector<8x128xf32>
    %315 = vector.broadcast %313 : vector<1x128xf32> to vector<8x128xf32>
    %316 = arith.mulf %314, %315 : vector<8x128xf32>
    %317 = arith.addf %311, %316 : vector<8x128xf32>
    %318 = vector.extract_strided_slice %273 {offsets = [0, 6], sizes = [8, 1], strides = [1, 1]} : vector<8x72xf32> to vector<8x1xf32>
    %319 = vector.extract_strided_slice %281 {offsets = [6, 0], sizes = [1, 128], strides = [1, 1]} : vector<8x128xf32> to vector<1x128xf32>
    %320 = vector.broadcast %318 : vector<8x1xf32> to vector<8x128xf32>
    %321 = vector.broadcast %319 : vector<1x128xf32> to vector<8x128xf32>
    %322 = arith.mulf %320, %321 : vector<8x128xf32>
    %323 = arith.addf %317, %322 : vector<8x128xf32>
    %324 = vector.extract_strided_slice %273 {offsets = [0, 7], sizes = [8, 1], strides = [1, 1]} : vector<8x72xf32> to vector<8x1xf32>
    %325 = vector.extract_strided_slice %281 {offsets = [7, 0], sizes = [1, 128], strides = [1, 1]} : vector<8x128xf32> to vector<1x128xf32>
    %326 = vector.broadcast %324 : vector<8x1xf32> to vector<8x128xf32>
    %327 = vector.broadcast %325 : vector<1x128xf32> to vector<8x128xf32>
    %328 = arith.mulf %326, %327 : vector<8x128xf32>
    %329 = arith.addf %323, %328 : vector<8x128xf32>
    %330 = vector.extract_strided_slice %272 {offsets = [0, 120], sizes = [8, 8], strides = [1, 1]} : vector<8x128xf32> to vector<8x8xf32>
    %331 = vector.extract_strided_slice %272 {offsets = [0, 0], sizes = [8, 120], strides = [1, 1]} : vector<8x128xf32> to vector<8x120xf32>
    %332 = tpu.concatenate %330, %331 in 1 : vector<8x8xf32>, vector<8x120xf32> -> vector<8x128xf32>
    %333 = vector.extract_strided_slice %0 {offsets = [1, 0], sizes = [1, 128], strides = [1, 1]} : vector<9x128xf32> to vector<1x128xf32>
    %334 = vector.broadcast %333 : vector<1x128xf32> to vector<8x128xf32>
    %335 = arith.mulf %332, %334 : vector<8x128xf32>
    %336 = vector.extract_strided_slice %273 {offsets = [0, 8], sizes = [8, 1], strides = [1, 1]} : vector<8x72xf32> to vector<8x1xf32>
    %337 = vector.extract_strided_slice %335 {offsets = [0, 0], sizes = [1, 128], strides = [1, 1]} : vector<8x128xf32> to vector<1x128xf32>
    %338 = vector.broadcast %336 : vector<8x1xf32> to vector<8x128xf32>
    %339 = vector.broadcast %337 : vector<1x128xf32> to vector<8x128xf32>
    %340 = arith.mulf %338, %339 : vector<8x128xf32>
    %341 = arith.addf %329, %340 : vector<8x128xf32>
    %342 = vector.extract_strided_slice %273 {offsets = [0, 9], sizes = [8, 1], strides = [1, 1]} : vector<8x72xf32> to vector<8x1xf32>
    %343 = vector.extract_strided_slice %335 {offsets = [1, 0], sizes = [1, 128], strides = [1, 1]} : vector<8x128xf32> to vector<1x128xf32>
    %344 = vector.broadcast %342 : vector<8x1xf32> to vector<8x128xf32>
    %345 = vector.broadcast %343 : vector<1x128xf32> to vector<8x128xf32>
    %346 = arith.mulf %344, %345 : vector<8x128xf32>
    %347 = arith.addf %341, %346 : vector<8x128xf32>
    %348 = vector.extract_strided_slice %273 {offsets = [0, 10], sizes = [8, 1], strides = [1, 1]} : vector<8x72xf32> to vector<8x1xf32>
    %349 = vector.extract_strided_slice %335 {offsets = [2, 0], sizes = [1, 128], strides = [1, 1]} : vector<8x128xf32> to vector<1x128xf32>
    %350 = vector.broadcast %348 : vector<8x1xf32> to vector<8x128xf32>
    %351 = vector.broadcast %349 : vector<1x128xf32> to vector<8x128xf32>
    %352 = arith.mulf %350, %351 : vector<8x128xf32>
    %353 = arith.addf %347, %352 : vector<8x128xf32>
    %354 = vector.extract_strided_slice %273 {offsets = [0, 11], sizes = [8, 1], strides = [1, 1]} : vector<8x72xf32> to vector<8x1xf32>
    %355 = vector.extract_strided_slice %335 {offsets = [3, 0], sizes = [1, 128], strides = [1, 1]} : vector<8x128xf32> to vector<1x128xf32>
    %356 = vector.broadcast %354 : vector<8x1xf32> to vector<8x128xf32>
    %357 = vector.broadcast %355 : vector<1x128xf32> to vector<8x128xf32>
    %358 = arith.mulf %356, %357 : vector<8x128xf32>
    %359 = arith.addf %353, %358 : vector<8x128xf32>
    %360 = vector.extract_strided_slice %273 {offsets = [0, 12], sizes = [8, 1], strides = [1, 1]} : vector<8x72xf32> to vector<8x1xf32>
    %361 = vector.extract_strided_slice %335 {offsets = [4, 0], sizes = [1, 128], strides = [1, 1]} : vector<8x128xf32> to vector<1x128xf32>
    %362 = vector.broadcast %360 : vector<8x1xf32> to vector<8x128xf32>
    %363 = vector.broadcast %361 : vector<1x128xf32> to vector<8x128xf32>
    %364 = arith.mulf %362, %363 : vector<8x128xf32>
    %365 = arith.addf %359, %364 : vector<8x128xf32>
    %366 = vector.extract_strided_slice %273 {offsets = [0, 13], sizes = [8, 1], strides = [1, 1]} : vector<8x72xf32> to vector<8x1xf32>
    %367 = vector.extract_strided_slice %335 {offsets = [5, 0], sizes = [1, 128], strides = [1, 1]} : vector<8x128xf32> to vector<1x128xf32>
    %368 = vector.broadcast %366 : vector<8x1xf32> to vector<8x128xf32>
    %369 = vector.broadcast %367 : vector<1x128xf32> to vector<8x128xf32>
    %370 = arith.mulf %368, %369 : vector<8x128xf32>
    %371 = arith.addf %365, %370 : vector<8x128xf32>
    %372 = vector.extract_strided_slice %273 {offsets = [0, 14], sizes = [8, 1], strides = [1, 1]} : vector<8x72xf32> to vector<8x1xf32>
    %373 = vector.extract_strided_slice %335 {offsets = [6, 0], sizes = [1, 128], strides = [1, 1]} : vector<8x128xf32> to vector<1x128xf32>
    %374 = vector.broadcast %372 : vector<8x1xf32> to vector<8x128xf32>
    %375 = vector.broadcast %373 : vector<1x128xf32> to vector<8x128xf32>
    %376 = arith.mulf %374, %375 : vector<8x128xf32>
    %377 = arith.addf %371, %376 : vector<8x128xf32>
    %378 = vector.extract_strided_slice %273 {offsets = [0, 15], sizes = [8, 1], strides = [1, 1]} : vector<8x72xf32> to vector<8x1xf32>
    %379 = vector.extract_strided_slice %335 {offsets = [7, 0], sizes = [1, 128], strides = [1, 1]} : vector<8x128xf32> to vector<1x128xf32>
    %380 = vector.broadcast %378 : vector<8x1xf32> to vector<8x128xf32>
    %381 = vector.broadcast %379 : vector<1x128xf32> to vector<8x128xf32>
    %382 = arith.mulf %380, %381 : vector<8x128xf32>
    %383 = arith.addf %377, %382 : vector<8x128xf32>
    %384 = vector.extract_strided_slice %272 {offsets = [0, 121], sizes = [8, 7], strides = [1, 1]} : vector<8x128xf32> to vector<8x7xf32>
    %385 = vector.extract_strided_slice %272 {offsets = [0, 0], sizes = [8, 121], strides = [1, 1]} : vector<8x128xf32> to vector<8x121xf32>
    %386 = tpu.concatenate %384, %385 in 1 : vector<8x7xf32>, vector<8x121xf32> -> vector<8x128xf32>
    %387 = vector.extract_strided_slice %0 {offsets = [2, 0], sizes = [1, 128], strides = [1, 1]} : vector<9x128xf32> to vector<1x128xf32>
    %388 = vector.broadcast %387 : vector<1x128xf32> to vector<8x128xf32>
    %389 = arith.mulf %386, %388 : vector<8x128xf32>
    %390 = vector.extract_strided_slice %273 {offsets = [0, 16], sizes = [8, 1], strides = [1, 1]} : vector<8x72xf32> to vector<8x1xf32>
    %391 = vector.extract_strided_slice %389 {offsets = [0, 0], sizes = [1, 128], strides = [1, 1]} : vector<8x128xf32> to vector<1x128xf32>
    %392 = vector.broadcast %390 : vector<8x1xf32> to vector<8x128xf32>
    %393 = vector.broadcast %391 : vector<1x128xf32> to vector<8x128xf32>
    %394 = arith.mulf %392, %393 : vector<8x128xf32>
    %395 = arith.addf %383, %394 : vector<8x128xf32>
    %396 = vector.extract_strided_slice %273 {offsets = [0, 17], sizes = [8, 1], strides = [1, 1]} : vector<8x72xf32> to vector<8x1xf32>
    %397 = vector.extract_strided_slice %389 {offsets = [1, 0], sizes = [1, 128], strides = [1, 1]} : vector<8x128xf32> to vector<1x128xf32>
    %398 = vector.broadcast %396 : vector<8x1xf32> to vector<8x128xf32>
    %399 = vector.broadcast %397 : vector<1x128xf32> to vector<8x128xf32>
    %400 = arith.mulf %398, %399 : vector<8x128xf32>
    %401 = arith.addf %395, %400 : vector<8x128xf32>
    %402 = vector.extract_strided_slice %273 {offsets = [0, 18], sizes = [8, 1], strides = [1, 1]} : vector<8x72xf32> to vector<8x1xf32>
    %403 = vector.extract_strided_slice %389 {offsets = [2, 0], sizes = [1, 128], strides = [1, 1]} : vector<8x128xf32> to vector<1x128xf32>
    %404 = vector.broadcast %402 : vector<8x1xf32> to vector<8x128xf32>
    %405 = vector.broadcast %403 : vector<1x128xf32> to vector<8x128xf32>
    %406 = arith.mulf %404, %405 : vector<8x128xf32>
    %407 = arith.addf %401, %406 : vector<8x128xf32>
    %408 = vector.extract_strided_slice %273 {offsets = [0, 19], sizes = [8, 1], strides = [1, 1]} : vector<8x72xf32> to vector<8x1xf32>
    %409 = vector.extract_strided_slice %389 {offsets = [3, 0], sizes = [1, 128], strides = [1, 1]} : vector<8x128xf32> to vector<1x128xf32>
    %410 = vector.broadcast %408 : vector<8x1xf32> to vector<8x128xf32>
    %411 = vector.broadcast %409 : vector<1x128xf32> to vector<8x128xf32>
    %412 = arith.mulf %410, %411 : vector<8x128xf32>
    %413 = arith.addf %407, %412 : vector<8x128xf32>
    %414 = vector.extract_strided_slice %273 {offsets = [0, 20], sizes = [8, 1], strides = [1, 1]} : vector<8x72xf32> to vector<8x1xf32>
    %415 = vector.extract_strided_slice %389 {offsets = [4, 0], sizes = [1, 128], strides = [1, 1]} : vector<8x128xf32> to vector<1x128xf32>
    %416 = vector.broadcast %414 : vector<8x1xf32> to vector<8x128xf32>
    %417 = vector.broadcast %415 : vector<1x128xf32> to vector<8x128xf32>
    %418 = arith.mulf %416, %417 : vector<8x128xf32>
    %419 = arith.addf %413, %418 : vector<8x128xf32>
    %420 = vector.extract_strided_slice %273 {offsets = [0, 21], sizes = [8, 1], strides = [1, 1]} : vector<8x72xf32> to vector<8x1xf32>
    %421 = vector.extract_strided_slice %389 {offsets = [5, 0], sizes = [1, 128], strides = [1, 1]} : vector<8x128xf32> to vector<1x128xf32>
    %422 = vector.broadcast %420 : vector<8x1xf32> to vector<8x128xf32>
    %423 = vector.broadcast %421 : vector<1x128xf32> to vector<8x128xf32>
    %424 = arith.mulf %422, %423 : vector<8x128xf32>
    %425 = arith.addf %419, %424 : vector<8x128xf32>
    %426 = vector.extract_strided_slice %273 {offsets = [0, 22], sizes = [8, 1], strides = [1, 1]} : vector<8x72xf32> to vector<8x1xf32>
    %427 = vector.extract_strided_slice %389 {offsets = [6, 0], sizes = [1, 128], strides = [1, 1]} : vector<8x128xf32> to vector<1x128xf32>
    %428 = vector.broadcast %426 : vector<8x1xf32> to vector<8x128xf32>
    %429 = vector.broadcast %427 : vector<1x128xf32> to vector<8x128xf32>
    %430 = arith.mulf %428, %429 : vector<8x128xf32>
    %431 = arith.addf %425, %430 : vector<8x128xf32>
    %432 = vector.extract_strided_slice %273 {offsets = [0, 23], sizes = [8, 1], strides = [1, 1]} : vector<8x72xf32> to vector<8x1xf32>
    %433 = vector.extract_strided_slice %389 {offsets = [7, 0], sizes = [1, 128], strides = [1, 1]} : vector<8x128xf32> to vector<1x128xf32>
    %434 = vector.broadcast %432 : vector<8x1xf32> to vector<8x128xf32>
    %435 = vector.broadcast %433 : vector<1x128xf32> to vector<8x128xf32>
    %436 = arith.mulf %434, %435 : vector<8x128xf32>
    %437 = arith.addf %431, %436 : vector<8x128xf32>
    %438 = vector.extract_strided_slice %272 {offsets = [0, 127], sizes = [8, 1], strides = [1, 1]} : vector<8x128xf32> to vector<8x1xf32>
    %439 = vector.extract_strided_slice %272 {offsets = [0, 0], sizes = [8, 127], strides = [1, 1]} : vector<8x128xf32> to vector<8x127xf32>
    %440 = tpu.concatenate %438, %439 in 1 : vector<8x1xf32>, vector<8x127xf32> -> vector<8x128xf32>
    %441 = vector.extract_strided_slice %0 {offsets = [3, 0], sizes = [1, 128], strides = [1, 1]} : vector<9x128xf32> to vector<1x128xf32>
    %442 = vector.broadcast %441 : vector<1x128xf32> to vector<8x128xf32>
    %443 = arith.mulf %440, %442 : vector<8x128xf32>
    %444 = vector.extract_strided_slice %273 {offsets = [0, 24], sizes = [8, 1], strides = [1, 1]} : vector<8x72xf32> to vector<8x1xf32>
    %445 = vector.extract_strided_slice %443 {offsets = [0, 0], sizes = [1, 128], strides = [1, 1]} : vector<8x128xf32> to vector<1x128xf32>
    %446 = vector.broadcast %444 : vector<8x1xf32> to vector<8x128xf32>
    %447 = vector.broadcast %445 : vector<1x128xf32> to vector<8x128xf32>
    %448 = arith.mulf %446, %447 : vector<8x128xf32>
    %449 = arith.addf %437, %448 : vector<8x128xf32>
    %450 = vector.extract_strided_slice %273 {offsets = [0, 25], sizes = [8, 1], strides = [1, 1]} : vector<8x72xf32> to vector<8x1xf32>
    %451 = vector.extract_strided_slice %443 {offsets = [1, 0], sizes = [1, 128], strides = [1, 1]} : vector<8x128xf32> to vector<1x128xf32>
    %452 = vector.broadcast %450 : vector<8x1xf32> to vector<8x128xf32>
    %453 = vector.broadcast %451 : vector<1x128xf32> to vector<8x128xf32>
    %454 = arith.mulf %452, %453 : vector<8x128xf32>
    %455 = arith.addf %449, %454 : vector<8x128xf32>
    %456 = vector.extract_strided_slice %273 {offsets = [0, 26], sizes = [8, 1], strides = [1, 1]} : vector<8x72xf32> to vector<8x1xf32>
    %457 = vector.extract_strided_slice %443 {offsets = [2, 0], sizes = [1, 128], strides = [1, 1]} : vector<8x128xf32> to vector<1x128xf32>
    %458 = vector.broadcast %456 : vector<8x1xf32> to vector<8x128xf32>
    %459 = vector.broadcast %457 : vector<1x128xf32> to vector<8x128xf32>
    %460 = arith.mulf %458, %459 : vector<8x128xf32>
    %461 = arith.addf %455, %460 : vector<8x128xf32>
    %462 = vector.extract_strided_slice %273 {offsets = [0, 27], sizes = [8, 1], strides = [1, 1]} : vector<8x72xf32> to vector<8x1xf32>
    %463 = vector.extract_strided_slice %443 {offsets = [3, 0], sizes = [1, 128], strides = [1, 1]} : vector<8x128xf32> to vector<1x128xf32>
    %464 = vector.broadcast %462 : vector<8x1xf32> to vector<8x128xf32>
    %465 = vector.broadcast %463 : vector<1x128xf32> to vector<8x128xf32>
    %466 = arith.mulf %464, %465 : vector<8x128xf32>
    %467 = arith.addf %461, %466 : vector<8x128xf32>
    %468 = vector.extract_strided_slice %273 {offsets = [0, 28], sizes = [8, 1], strides = [1, 1]} : vector<8x72xf32> to vector<8x1xf32>
    %469 = vector.extract_strided_slice %443 {offsets = [4, 0], sizes = [1, 128], strides = [1, 1]} : vector<8x128xf32> to vector<1x128xf32>
    %470 = vector.broadcast %468 : vector<8x1xf32> to vector<8x128xf32>
    %471 = vector.broadcast %469 : vector<1x128xf32> to vector<8x128xf32>
    %472 = arith.mulf %470, %471 : vector<8x128xf32>
    %473 = arith.addf %467, %472 : vector<8x128xf32>
    %474 = vector.extract_strided_slice %273 {offsets = [0, 29], sizes = [8, 1], strides = [1, 1]} : vector<8x72xf32> to vector<8x1xf32>
    %475 = vector.extract_strided_slice %443 {offsets = [5, 0], sizes = [1, 128], strides = [1, 1]} : vector<8x128xf32> to vector<1x128xf32>
    %476 = vector.broadcast %474 : vector<8x1xf32> to vector<8x128xf32>
    %477 = vector.broadcast %475 : vector<1x128xf32> to vector<8x128xf32>
    %478 = arith.mulf %476, %477 : vector<8x128xf32>
    %479 = arith.addf %473, %478 : vector<8x128xf32>
    %480 = vector.extract_strided_slice %273 {offsets = [0, 30], sizes = [8, 1], strides = [1, 1]} : vector<8x72xf32> to vector<8x1xf32>
    %481 = vector.extract_strided_slice %443 {offsets = [6, 0], sizes = [1, 128], strides = [1, 1]} : vector<8x128xf32> to vector<1x128xf32>
    %482 = vector.broadcast %480 : vector<8x1xf32> to vector<8x128xf32>
    %483 = vector.broadcast %481 : vector<1x128xf32> to vector<8x128xf32>
    %484 = arith.mulf %482, %483 : vector<8x128xf32>
    %485 = arith.addf %479, %484 : vector<8x128xf32>
    %486 = vector.extract_strided_slice %273 {offsets = [0, 31], sizes = [8, 1], strides = [1, 1]} : vector<8x72xf32> to vector<8x1xf32>
    %487 = vector.extract_strided_slice %443 {offsets = [7, 0], sizes = [1, 128], strides = [1, 1]} : vector<8x128xf32> to vector<1x128xf32>
    %488 = vector.broadcast %486 : vector<8x1xf32> to vector<8x128xf32>
    %489 = vector.broadcast %487 : vector<1x128xf32> to vector<8x128xf32>
    %490 = arith.mulf %488, %489 : vector<8x128xf32>
    %491 = arith.addf %485, %490 : vector<8x128xf32>
    %492 = vector.extract_strided_slice %273 {offsets = [0, 32], sizes = [8, 1], strides = [1, 1]} : vector<8x72xf32> to vector<8x1xf32>
    %493 = vector.extract_strided_slice %272 {offsets = [0, 0], sizes = [1, 128], strides = [1, 1]} : vector<8x128xf32> to vector<1x128xf32>
    %494 = vector.broadcast %492 : vector<8x1xf32> to vector<8x128xf32>
    %495 = vector.broadcast %493 : vector<1x128xf32> to vector<8x128xf32>
    %496 = arith.mulf %494, %495 : vector<8x128xf32>
    %497 = arith.addf %491, %496 : vector<8x128xf32>
    %498 = vector.extract_strided_slice %273 {offsets = [0, 33], sizes = [8, 1], strides = [1, 1]} : vector<8x72xf32> to vector<8x1xf32>
    %499 = vector.extract_strided_slice %272 {offsets = [1, 0], sizes = [1, 128], strides = [1, 1]} : vector<8x128xf32> to vector<1x128xf32>
    %500 = vector.broadcast %498 : vector<8x1xf32> to vector<8x128xf32>
    %501 = vector.broadcast %499 : vector<1x128xf32> to vector<8x128xf32>
    %502 = arith.mulf %500, %501 : vector<8x128xf32>
    %503 = arith.addf %497, %502 : vector<8x128xf32>
    %504 = vector.extract_strided_slice %273 {offsets = [0, 34], sizes = [8, 1], strides = [1, 1]} : vector<8x72xf32> to vector<8x1xf32>
    %505 = vector.extract_strided_slice %272 {offsets = [2, 0], sizes = [1, 128], strides = [1, 1]} : vector<8x128xf32> to vector<1x128xf32>
    %506 = vector.broadcast %504 : vector<8x1xf32> to vector<8x128xf32>
    %507 = vector.broadcast %505 : vector<1x128xf32> to vector<8x128xf32>
    %508 = arith.mulf %506, %507 : vector<8x128xf32>
    %509 = arith.addf %503, %508 : vector<8x128xf32>
    %510 = vector.extract_strided_slice %273 {offsets = [0, 35], sizes = [8, 1], strides = [1, 1]} : vector<8x72xf32> to vector<8x1xf32>
    %511 = vector.extract_strided_slice %272 {offsets = [3, 0], sizes = [1, 128], strides = [1, 1]} : vector<8x128xf32> to vector<1x128xf32>
    %512 = vector.broadcast %510 : vector<8x1xf32> to vector<8x128xf32>
    %513 = vector.broadcast %511 : vector<1x128xf32> to vector<8x128xf32>
    %514 = arith.mulf %512, %513 : vector<8x128xf32>
    %515 = arith.addf %509, %514 : vector<8x128xf32>
    %516 = vector.extract_strided_slice %273 {offsets = [0, 36], sizes = [8, 1], strides = [1, 1]} : vector<8x72xf32> to vector<8x1xf32>
    %517 = vector.extract_strided_slice %272 {offsets = [4, 0], sizes = [1, 128], strides = [1, 1]} : vector<8x128xf32> to vector<1x128xf32>
    %518 = vector.broadcast %516 : vector<8x1xf32> to vector<8x128xf32>
    %519 = vector.broadcast %517 : vector<1x128xf32> to vector<8x128xf32>
    %520 = arith.mulf %518, %519 : vector<8x128xf32>
    %521 = arith.addf %515, %520 : vector<8x128xf32>
    %522 = vector.extract_strided_slice %273 {offsets = [0, 37], sizes = [8, 1], strides = [1, 1]} : vector<8x72xf32> to vector<8x1xf32>
    %523 = vector.extract_strided_slice %272 {offsets = [5, 0], sizes = [1, 128], strides = [1, 1]} : vector<8x128xf32> to vector<1x128xf32>
    %524 = vector.broadcast %522 : vector<8x1xf32> to vector<8x128xf32>
    %525 = vector.broadcast %523 : vector<1x128xf32> to vector<8x128xf32>
    %526 = arith.mulf %524, %525 : vector<8x128xf32>
    %527 = arith.addf %521, %526 : vector<8x128xf32>
    %528 = vector.extract_strided_slice %273 {offsets = [0, 38], sizes = [8, 1], strides = [1, 1]} : vector<8x72xf32> to vector<8x1xf32>
    %529 = vector.extract_strided_slice %272 {offsets = [6, 0], sizes = [1, 128], strides = [1, 1]} : vector<8x128xf32> to vector<1x128xf32>
    %530 = vector.broadcast %528 : vector<8x1xf32> to vector<8x128xf32>
    %531 = vector.broadcast %529 : vector<1x128xf32> to vector<8x128xf32>
    %532 = arith.mulf %530, %531 : vector<8x128xf32>
    %533 = arith.addf %527, %532 : vector<8x128xf32>
    %534 = vector.extract_strided_slice %273 {offsets = [0, 39], sizes = [8, 1], strides = [1, 1]} : vector<8x72xf32> to vector<8x1xf32>
    %535 = vector.extract_strided_slice %272 {offsets = [7, 0], sizes = [1, 128], strides = [1, 1]} : vector<8x128xf32> to vector<1x128xf32>
    %536 = vector.broadcast %534 : vector<8x1xf32> to vector<8x128xf32>
    %537 = vector.broadcast %535 : vector<1x128xf32> to vector<8x128xf32>
    %538 = arith.mulf %536, %537 : vector<8x128xf32>
    %539 = arith.addf %533, %538 : vector<8x128xf32>
    %540 = vector.extract_strided_slice %272 {offsets = [0, 1], sizes = [8, 127], strides = [1, 1]} : vector<8x128xf32> to vector<8x127xf32>
    %541 = vector.extract_strided_slice %272 {offsets = [0, 0], sizes = [8, 1], strides = [1, 1]} : vector<8x128xf32> to vector<8x1xf32>
    %542 = tpu.concatenate %540, %541 in 1 : vector<8x127xf32>, vector<8x1xf32> -> vector<8x128xf32>
    %543 = vector.extract_strided_slice %0 {offsets = [5, 0], sizes = [1, 128], strides = [1, 1]} : vector<9x128xf32> to vector<1x128xf32>
    %544 = vector.broadcast %543 : vector<1x128xf32> to vector<8x128xf32>
    %545 = arith.mulf %542, %544 : vector<8x128xf32>
    %546 = vector.extract_strided_slice %273 {offsets = [0, 40], sizes = [8, 1], strides = [1, 1]} : vector<8x72xf32> to vector<8x1xf32>
    %547 = vector.extract_strided_slice %545 {offsets = [0, 0], sizes = [1, 128], strides = [1, 1]} : vector<8x128xf32> to vector<1x128xf32>
    %548 = vector.broadcast %546 : vector<8x1xf32> to vector<8x128xf32>
    %549 = vector.broadcast %547 : vector<1x128xf32> to vector<8x128xf32>
    %550 = arith.mulf %548, %549 : vector<8x128xf32>
    %551 = arith.addf %539, %550 : vector<8x128xf32>
    %552 = vector.extract_strided_slice %273 {offsets = [0, 41], sizes = [8, 1], strides = [1, 1]} : vector<8x72xf32> to vector<8x1xf32>
    %553 = vector.extract_strided_slice %545 {offsets = [1, 0], sizes = [1, 128], strides = [1, 1]} : vector<8x128xf32> to vector<1x128xf32>
    %554 = vector.broadcast %552 : vector<8x1xf32> to vector<8x128xf32>
    %555 = vector.broadcast %553 : vector<1x128xf32> to vector<8x128xf32>
    %556 = arith.mulf %554, %555 : vector<8x128xf32>
    %557 = arith.addf %551, %556 : vector<8x128xf32>
    %558 = vector.extract_strided_slice %273 {offsets = [0, 42], sizes = [8, 1], strides = [1, 1]} : vector<8x72xf32> to vector<8x1xf32>
    %559 = vector.extract_strided_slice %545 {offsets = [2, 0], sizes = [1, 128], strides = [1, 1]} : vector<8x128xf32> to vector<1x128xf32>
    %560 = vector.broadcast %558 : vector<8x1xf32> to vector<8x128xf32>
    %561 = vector.broadcast %559 : vector<1x128xf32> to vector<8x128xf32>
    %562 = arith.mulf %560, %561 : vector<8x128xf32>
    %563 = arith.addf %557, %562 : vector<8x128xf32>
    %564 = vector.extract_strided_slice %273 {offsets = [0, 43], sizes = [8, 1], strides = [1, 1]} : vector<8x72xf32> to vector<8x1xf32>
    %565 = vector.extract_strided_slice %545 {offsets = [3, 0], sizes = [1, 128], strides = [1, 1]} : vector<8x128xf32> to vector<1x128xf32>
    %566 = vector.broadcast %564 : vector<8x1xf32> to vector<8x128xf32>
    %567 = vector.broadcast %565 : vector<1x128xf32> to vector<8x128xf32>
    %568 = arith.mulf %566, %567 : vector<8x128xf32>
    %569 = arith.addf %563, %568 : vector<8x128xf32>
    %570 = vector.extract_strided_slice %273 {offsets = [0, 44], sizes = [8, 1], strides = [1, 1]} : vector<8x72xf32> to vector<8x1xf32>
    %571 = vector.extract_strided_slice %545 {offsets = [4, 0], sizes = [1, 128], strides = [1, 1]} : vector<8x128xf32> to vector<1x128xf32>
    %572 = vector.broadcast %570 : vector<8x1xf32> to vector<8x128xf32>
    %573 = vector.broadcast %571 : vector<1x128xf32> to vector<8x128xf32>
    %574 = arith.mulf %572, %573 : vector<8x128xf32>
    %575 = arith.addf %569, %574 : vector<8x128xf32>
    %576 = vector.extract_strided_slice %273 {offsets = [0, 45], sizes = [8, 1], strides = [1, 1]} : vector<8x72xf32> to vector<8x1xf32>
    %577 = vector.extract_strided_slice %545 {offsets = [5, 0], sizes = [1, 128], strides = [1, 1]} : vector<8x128xf32> to vector<1x128xf32>
    %578 = vector.broadcast %576 : vector<8x1xf32> to vector<8x128xf32>
    %579 = vector.broadcast %577 : vector<1x128xf32> to vector<8x128xf32>
    %580 = arith.mulf %578, %579 : vector<8x128xf32>
    %581 = arith.addf %575, %580 : vector<8x128xf32>
    %582 = vector.extract_strided_slice %273 {offsets = [0, 46], sizes = [8, 1], strides = [1, 1]} : vector<8x72xf32> to vector<8x1xf32>
    %583 = vector.extract_strided_slice %545 {offsets = [6, 0], sizes = [1, 128], strides = [1, 1]} : vector<8x128xf32> to vector<1x128xf32>
    %584 = vector.broadcast %582 : vector<8x1xf32> to vector<8x128xf32>
    %585 = vector.broadcast %583 : vector<1x128xf32> to vector<8x128xf32>
    %586 = arith.mulf %584, %585 : vector<8x128xf32>
    %587 = arith.addf %581, %586 : vector<8x128xf32>
    %588 = vector.extract_strided_slice %273 {offsets = [0, 47], sizes = [8, 1], strides = [1, 1]} : vector<8x72xf32> to vector<8x1xf32>
    %589 = vector.extract_strided_slice %545 {offsets = [7, 0], sizes = [1, 128], strides = [1, 1]} : vector<8x128xf32> to vector<1x128xf32>
    %590 = vector.broadcast %588 : vector<8x1xf32> to vector<8x128xf32>
    %591 = vector.broadcast %589 : vector<1x128xf32> to vector<8x128xf32>
    %592 = arith.mulf %590, %591 : vector<8x128xf32>
    %593 = arith.addf %587, %592 : vector<8x128xf32>
    %594 = vector.extract_strided_slice %272 {offsets = [0, 7], sizes = [8, 121], strides = [1, 1]} : vector<8x128xf32> to vector<8x121xf32>
    %595 = vector.extract_strided_slice %272 {offsets = [0, 0], sizes = [8, 7], strides = [1, 1]} : vector<8x128xf32> to vector<8x7xf32>
    %596 = tpu.concatenate %594, %595 in 1 : vector<8x121xf32>, vector<8x7xf32> -> vector<8x128xf32>
    %597 = vector.extract_strided_slice %0 {offsets = [6, 0], sizes = [1, 128], strides = [1, 1]} : vector<9x128xf32> to vector<1x128xf32>
    %598 = vector.broadcast %597 : vector<1x128xf32> to vector<8x128xf32>
    %599 = arith.mulf %596, %598 : vector<8x128xf32>
    %600 = vector.extract_strided_slice %273 {offsets = [0, 48], sizes = [8, 1], strides = [1, 1]} : vector<8x72xf32> to vector<8x1xf32>
    %601 = vector.extract_strided_slice %599 {offsets = [0, 0], sizes = [1, 128], strides = [1, 1]} : vector<8x128xf32> to vector<1x128xf32>
    %602 = vector.broadcast %600 : vector<8x1xf32> to vector<8x128xf32>
    %603 = vector.broadcast %601 : vector<1x128xf32> to vector<8x128xf32>
    %604 = arith.mulf %602, %603 : vector<8x128xf32>
    %605 = arith.addf %593, %604 : vector<8x128xf32>
    %606 = vector.extract_strided_slice %273 {offsets = [0, 49], sizes = [8, 1], strides = [1, 1]} : vector<8x72xf32> to vector<8x1xf32>
    %607 = vector.extract_strided_slice %599 {offsets = [1, 0], sizes = [1, 128], strides = [1, 1]} : vector<8x128xf32> to vector<1x128xf32>
    %608 = vector.broadcast %606 : vector<8x1xf32> to vector<8x128xf32>
    %609 = vector.broadcast %607 : vector<1x128xf32> to vector<8x128xf32>
    %610 = arith.mulf %608, %609 : vector<8x128xf32>
    %611 = arith.addf %605, %610 : vector<8x128xf32>
    %612 = vector.extract_strided_slice %273 {offsets = [0, 50], sizes = [8, 1], strides = [1, 1]} : vector<8x72xf32> to vector<8x1xf32>
    %613 = vector.extract_strided_slice %599 {offsets = [2, 0], sizes = [1, 128], strides = [1, 1]} : vector<8x128xf32> to vector<1x128xf32>
    %614 = vector.broadcast %612 : vector<8x1xf32> to vector<8x128xf32>
    %615 = vector.broadcast %613 : vector<1x128xf32> to vector<8x128xf32>
    %616 = arith.mulf %614, %615 : vector<8x128xf32>
    %617 = arith.addf %611, %616 : vector<8x128xf32>
    %618 = vector.extract_strided_slice %273 {offsets = [0, 51], sizes = [8, 1], strides = [1, 1]} : vector<8x72xf32> to vector<8x1xf32>
    %619 = vector.extract_strided_slice %599 {offsets = [3, 0], sizes = [1, 128], strides = [1, 1]} : vector<8x128xf32> to vector<1x128xf32>
    %620 = vector.broadcast %618 : vector<8x1xf32> to vector<8x128xf32>
    %621 = vector.broadcast %619 : vector<1x128xf32> to vector<8x128xf32>
    %622 = arith.mulf %620, %621 : vector<8x128xf32>
    %623 = arith.addf %617, %622 : vector<8x128xf32>
    %624 = vector.extract_strided_slice %273 {offsets = [0, 52], sizes = [8, 1], strides = [1, 1]} : vector<8x72xf32> to vector<8x1xf32>
    %625 = vector.extract_strided_slice %599 {offsets = [4, 0], sizes = [1, 128], strides = [1, 1]} : vector<8x128xf32> to vector<1x128xf32>
    %626 = vector.broadcast %624 : vector<8x1xf32> to vector<8x128xf32>
    %627 = vector.broadcast %625 : vector<1x128xf32> to vector<8x128xf32>
    %628 = arith.mulf %626, %627 : vector<8x128xf32>
    %629 = arith.addf %623, %628 : vector<8x128xf32>
    %630 = vector.extract_strided_slice %273 {offsets = [0, 53], sizes = [8, 1], strides = [1, 1]} : vector<8x72xf32> to vector<8x1xf32>
    %631 = vector.extract_strided_slice %599 {offsets = [5, 0], sizes = [1, 128], strides = [1, 1]} : vector<8x128xf32> to vector<1x128xf32>
    %632 = vector.broadcast %630 : vector<8x1xf32> to vector<8x128xf32>
    %633 = vector.broadcast %631 : vector<1x128xf32> to vector<8x128xf32>
    %634 = arith.mulf %632, %633 : vector<8x128xf32>
    %635 = arith.addf %629, %634 : vector<8x128xf32>
    %636 = vector.extract_strided_slice %273 {offsets = [0, 54], sizes = [8, 1], strides = [1, 1]} : vector<8x72xf32> to vector<8x1xf32>
    %637 = vector.extract_strided_slice %599 {offsets = [6, 0], sizes = [1, 128], strides = [1, 1]} : vector<8x128xf32> to vector<1x128xf32>
    %638 = vector.broadcast %636 : vector<8x1xf32> to vector<8x128xf32>
    %639 = vector.broadcast %637 : vector<1x128xf32> to vector<8x128xf32>
    %640 = arith.mulf %638, %639 : vector<8x128xf32>
    %641 = arith.addf %635, %640 : vector<8x128xf32>
    %642 = vector.extract_strided_slice %273 {offsets = [0, 55], sizes = [8, 1], strides = [1, 1]} : vector<8x72xf32> to vector<8x1xf32>
    %643 = vector.extract_strided_slice %599 {offsets = [7, 0], sizes = [1, 128], strides = [1, 1]} : vector<8x128xf32> to vector<1x128xf32>
    %644 = vector.broadcast %642 : vector<8x1xf32> to vector<8x128xf32>
    %645 = vector.broadcast %643 : vector<1x128xf32> to vector<8x128xf32>
    %646 = arith.mulf %644, %645 : vector<8x128xf32>
    %647 = arith.addf %641, %646 : vector<8x128xf32>
    %648 = vector.extract_strided_slice %272 {offsets = [0, 8], sizes = [8, 120], strides = [1, 1]} : vector<8x128xf32> to vector<8x120xf32>
    %649 = vector.extract_strided_slice %272 {offsets = [0, 0], sizes = [8, 8], strides = [1, 1]} : vector<8x128xf32> to vector<8x8xf32>
    %650 = tpu.concatenate %648, %649 in 1 : vector<8x120xf32>, vector<8x8xf32> -> vector<8x128xf32>
    %651 = vector.extract_strided_slice %0 {offsets = [7, 0], sizes = [1, 128], strides = [1, 1]} : vector<9x128xf32> to vector<1x128xf32>
    %652 = vector.broadcast %651 : vector<1x128xf32> to vector<8x128xf32>
    %653 = arith.mulf %650, %652 : vector<8x128xf32>
    %654 = vector.extract_strided_slice %273 {offsets = [0, 56], sizes = [8, 1], strides = [1, 1]} : vector<8x72xf32> to vector<8x1xf32>
    %655 = vector.extract_strided_slice %653 {offsets = [0, 0], sizes = [1, 128], strides = [1, 1]} : vector<8x128xf32> to vector<1x128xf32>
    %656 = vector.broadcast %654 : vector<8x1xf32> to vector<8x128xf32>
    %657 = vector.broadcast %655 : vector<1x128xf32> to vector<8x128xf32>
    %658 = arith.mulf %656, %657 : vector<8x128xf32>
    %659 = arith.addf %647, %658 : vector<8x128xf32>
    %660 = vector.extract_strided_slice %273 {offsets = [0, 57], sizes = [8, 1], strides = [1, 1]} : vector<8x72xf32> to vector<8x1xf32>
    %661 = vector.extract_strided_slice %653 {offsets = [1, 0], sizes = [1, 128], strides = [1, 1]} : vector<8x128xf32> to vector<1x128xf32>
    %662 = vector.broadcast %660 : vector<8x1xf32> to vector<8x128xf32>
    %663 = vector.broadcast %661 : vector<1x128xf32> to vector<8x128xf32>
    %664 = arith.mulf %662, %663 : vector<8x128xf32>
    %665 = arith.addf %659, %664 : vector<8x128xf32>
    %666 = vector.extract_strided_slice %273 {offsets = [0, 58], sizes = [8, 1], strides = [1, 1]} : vector<8x72xf32> to vector<8x1xf32>
    %667 = vector.extract_strided_slice %653 {offsets = [2, 0], sizes = [1, 128], strides = [1, 1]} : vector<8x128xf32> to vector<1x128xf32>
    %668 = vector.broadcast %666 : vector<8x1xf32> to vector<8x128xf32>
    %669 = vector.broadcast %667 : vector<1x128xf32> to vector<8x128xf32>
    %670 = arith.mulf %668, %669 : vector<8x128xf32>
    %671 = arith.addf %665, %670 : vector<8x128xf32>
    %672 = vector.extract_strided_slice %273 {offsets = [0, 59], sizes = [8, 1], strides = [1, 1]} : vector<8x72xf32> to vector<8x1xf32>
    %673 = vector.extract_strided_slice %653 {offsets = [3, 0], sizes = [1, 128], strides = [1, 1]} : vector<8x128xf32> to vector<1x128xf32>
    %674 = vector.broadcast %672 : vector<8x1xf32> to vector<8x128xf32>
    %675 = vector.broadcast %673 : vector<1x128xf32> to vector<8x128xf32>
    %676 = arith.mulf %674, %675 : vector<8x128xf32>
    %677 = arith.addf %671, %676 : vector<8x128xf32>
    %678 = vector.extract_strided_slice %273 {offsets = [0, 60], sizes = [8, 1], strides = [1, 1]} : vector<8x72xf32> to vector<8x1xf32>
    %679 = vector.extract_strided_slice %653 {offsets = [4, 0], sizes = [1, 128], strides = [1, 1]} : vector<8x128xf32> to vector<1x128xf32>
    %680 = vector.broadcast %678 : vector<8x1xf32> to vector<8x128xf32>
    %681 = vector.broadcast %679 : vector<1x128xf32> to vector<8x128xf32>
    %682 = arith.mulf %680, %681 : vector<8x128xf32>
    %683 = arith.addf %677, %682 : vector<8x128xf32>
    %684 = vector.extract_strided_slice %273 {offsets = [0, 61], sizes = [8, 1], strides = [1, 1]} : vector<8x72xf32> to vector<8x1xf32>
    %685 = vector.extract_strided_slice %653 {offsets = [5, 0], sizes = [1, 128], strides = [1, 1]} : vector<8x128xf32> to vector<1x128xf32>
    %686 = vector.broadcast %684 : vector<8x1xf32> to vector<8x128xf32>
    %687 = vector.broadcast %685 : vector<1x128xf32> to vector<8x128xf32>
    %688 = arith.mulf %686, %687 : vector<8x128xf32>
    %689 = arith.addf %683, %688 : vector<8x128xf32>
    %690 = vector.extract_strided_slice %273 {offsets = [0, 62], sizes = [8, 1], strides = [1, 1]} : vector<8x72xf32> to vector<8x1xf32>
    %691 = vector.extract_strided_slice %653 {offsets = [6, 0], sizes = [1, 128], strides = [1, 1]} : vector<8x128xf32> to vector<1x128xf32>
    %692 = vector.broadcast %690 : vector<8x1xf32> to vector<8x128xf32>
    %693 = vector.broadcast %691 : vector<1x128xf32> to vector<8x128xf32>
    %694 = arith.mulf %692, %693 : vector<8x128xf32>
    %695 = arith.addf %689, %694 : vector<8x128xf32>
    %696 = vector.extract_strided_slice %273 {offsets = [0, 63], sizes = [8, 1], strides = [1, 1]} : vector<8x72xf32> to vector<8x1xf32>
    %697 = vector.extract_strided_slice %653 {offsets = [7, 0], sizes = [1, 128], strides = [1, 1]} : vector<8x128xf32> to vector<1x128xf32>
    %698 = vector.broadcast %696 : vector<8x1xf32> to vector<8x128xf32>
    %699 = vector.broadcast %697 : vector<1x128xf32> to vector<8x128xf32>
    %700 = arith.mulf %698, %699 : vector<8x128xf32>
    %701 = arith.addf %695, %700 : vector<8x128xf32>
    %702 = vector.extract_strided_slice %272 {offsets = [0, 9], sizes = [8, 119], strides = [1, 1]} : vector<8x128xf32> to vector<8x119xf32>
    %703 = vector.extract_strided_slice %272 {offsets = [0, 0], sizes = [8, 9], strides = [1, 1]} : vector<8x128xf32> to vector<8x9xf32>
    %704 = tpu.concatenate %702, %703 in 1 : vector<8x119xf32>, vector<8x9xf32> -> vector<8x128xf32>
    %705 = vector.extract_strided_slice %0 {offsets = [8, 0], sizes = [1, 128], strides = [1, 1]} : vector<9x128xf32> to vector<1x128xf32>
    %706 = vector.broadcast %705 : vector<1x128xf32> to vector<8x128xf32>
    %707 = arith.mulf %704, %706 : vector<8x128xf32>
    %708 = vector.extract_strided_slice %273 {offsets = [0, 64], sizes = [8, 1], strides = [1, 1]} : vector<8x72xf32> to vector<8x1xf32>
    %709 = vector.extract_strided_slice %707 {offsets = [0, 0], sizes = [1, 128], strides = [1, 1]} : vector<8x128xf32> to vector<1x128xf32>
    %710 = vector.broadcast %708 : vector<8x1xf32> to vector<8x128xf32>
    %711 = vector.broadcast %709 : vector<1x128xf32> to vector<8x128xf32>
    %712 = arith.mulf %710, %711 : vector<8x128xf32>
    %713 = arith.addf %701, %712 : vector<8x128xf32>
    %714 = vector.extract_strided_slice %273 {offsets = [0, 65], sizes = [8, 1], strides = [1, 1]} : vector<8x72xf32> to vector<8x1xf32>
    %715 = vector.extract_strided_slice %707 {offsets = [1, 0], sizes = [1, 128], strides = [1, 1]} : vector<8x128xf32> to vector<1x128xf32>
    %716 = vector.broadcast %714 : vector<8x1xf32> to vector<8x128xf32>
    %717 = vector.broadcast %715 : vector<1x128xf32> to vector<8x128xf32>
    %718 = arith.mulf %716, %717 : vector<8x128xf32>
    %719 = arith.addf %713, %718 : vector<8x128xf32>
    %720 = vector.extract_strided_slice %273 {offsets = [0, 66], sizes = [8, 1], strides = [1, 1]} : vector<8x72xf32> to vector<8x1xf32>
    %721 = vector.extract_strided_slice %707 {offsets = [2, 0], sizes = [1, 128], strides = [1, 1]} : vector<8x128xf32> to vector<1x128xf32>
    %722 = vector.broadcast %720 : vector<8x1xf32> to vector<8x128xf32>
    %723 = vector.broadcast %721 : vector<1x128xf32> to vector<8x128xf32>
    %724 = arith.mulf %722, %723 : vector<8x128xf32>
    %725 = arith.addf %719, %724 : vector<8x128xf32>
    %726 = vector.extract_strided_slice %273 {offsets = [0, 67], sizes = [8, 1], strides = [1, 1]} : vector<8x72xf32> to vector<8x1xf32>
    %727 = vector.extract_strided_slice %707 {offsets = [3, 0], sizes = [1, 128], strides = [1, 1]} : vector<8x128xf32> to vector<1x128xf32>
    %728 = vector.broadcast %726 : vector<8x1xf32> to vector<8x128xf32>
    %729 = vector.broadcast %727 : vector<1x128xf32> to vector<8x128xf32>
    %730 = arith.mulf %728, %729 : vector<8x128xf32>
    %731 = arith.addf %725, %730 : vector<8x128xf32>
    %732 = vector.extract_strided_slice %273 {offsets = [0, 68], sizes = [8, 1], strides = [1, 1]} : vector<8x72xf32> to vector<8x1xf32>
    %733 = vector.extract_strided_slice %707 {offsets = [4, 0], sizes = [1, 128], strides = [1, 1]} : vector<8x128xf32> to vector<1x128xf32>
    %734 = vector.broadcast %732 : vector<8x1xf32> to vector<8x128xf32>
    %735 = vector.broadcast %733 : vector<1x128xf32> to vector<8x128xf32>
    %736 = arith.mulf %734, %735 : vector<8x128xf32>
    %737 = arith.addf %731, %736 : vector<8x128xf32>
    %738 = vector.extract_strided_slice %273 {offsets = [0, 69], sizes = [8, 1], strides = [1, 1]} : vector<8x72xf32> to vector<8x1xf32>
    %739 = vector.extract_strided_slice %707 {offsets = [5, 0], sizes = [1, 128], strides = [1, 1]} : vector<8x128xf32> to vector<1x128xf32>
    %740 = vector.broadcast %738 : vector<8x1xf32> to vector<8x128xf32>
    %741 = vector.broadcast %739 : vector<1x128xf32> to vector<8x128xf32>
    %742 = arith.mulf %740, %741 : vector<8x128xf32>
    %743 = arith.addf %737, %742 : vector<8x128xf32>
    %744 = vector.extract_strided_slice %273 {offsets = [0, 70], sizes = [8, 1], strides = [1, 1]} : vector<8x72xf32> to vector<8x1xf32>
    %745 = vector.extract_strided_slice %707 {offsets = [6, 0], sizes = [1, 128], strides = [1, 1]} : vector<8x128xf32> to vector<1x128xf32>
    %746 = vector.broadcast %744 : vector<8x1xf32> to vector<8x128xf32>
    %747 = vector.broadcast %745 : vector<1x128xf32> to vector<8x128xf32>
    %748 = arith.mulf %746, %747 : vector<8x128xf32>
    %749 = arith.addf %743, %748 : vector<8x128xf32>
    %750 = vector.extract_strided_slice %273 {offsets = [0, 71], sizes = [8, 1], strides = [1, 1]} : vector<8x72xf32> to vector<8x1xf32>
    %751 = vector.extract_strided_slice %707 {offsets = [7, 0], sizes = [1, 128], strides = [1, 1]} : vector<8x128xf32> to vector<1x128xf32>
    %752 = vector.broadcast %750 : vector<8x1xf32> to vector<8x128xf32>
    %753 = vector.broadcast %751 : vector<1x128xf32> to vector<8x128xf32>
    %754 = arith.mulf %752, %753 : vector<8x128xf32>
    %755 = arith.addf %749, %754 : vector<8x128xf32>
    %756 = vector.broadcast %274 : vector<8x1xf32> to vector<8x128xf32>
    %757 = arith.addf %755, %756 : vector<8x128xf32>
    %cst_13 = arith.constant 0.000000e+00 : f32
    %758 = vector.broadcast %cst_13 : f32 to vector<8x128xf32>
    %759 = arith.maximumf %757, %758 : vector<8x128xf32>
    %c0_14 = arith.constant 0 : index
    %c0_15 = arith.constant 0 : index
    %760 = vector.load %arg6[%c0_14, %c0_15] : memref<8x128xf32, #tpu.memory_space<vmem>>, vector<8x128xf32>
    tpu.vector_store %arg6[%c0_14, %c0_15], %759 {strides = array<i32>} : memref<8x128xf32, #tpu.memory_space<vmem>>, vector<8x128xf32>,
    return
  }
}

</mosaic_0001>

<llo_original>
// kernel: down_forward.1
$region0: #{down_forward.1}
  #allocation0 [shape = 'u32[]', space=smem, size = 0x4, offset = 0x4, fixed_abs, tag = 'smem constant byte address 0x4 - core index']
  #allocation1 [shape = 'u32[144,128]{1,0:T(1,128)}', space=vmem, size = 0x12000, scoped, tag = 'internal scratch']
  %s0 = inlined_call_operand.vmem [shape: f32[4,128], index: 0, kind: input, shape index: {}]
  %s1 = inlined_call_operand.vmem [shape: f32[8,36], index: 1, kind: input, shape index: {}]
  %s2 = inlined_call_operand.vmem [shape: f32[8,1], index: 2, kind: input, shape index: {}]
  %s3 = inlined_call_operand.vmem [shape: f32[8,72], index: 3, kind: input, shape index: {}]
  %s4 = inlined_call_operand.vmem [shape: f32[8,1], index: 4, kind: input, shape index: {}]
  %s5 = inlined_call_operand.vmem [shape: f32[9,128], index: 5, kind: input, shape index: {}]
  %s6 = inlined_call_operand.vmem [shape: f32[8,128], index: 6, kind: output, shape index: {}]
  %s7 = sld [smem:[#allocation0]]
  $region34: #{down_forward.1} parent=0
    _
  %s9 = ssub.s32 1, %s7
  %s10 = scalar_select 0, %s9, %s7
  // Predicated region
  $region2: #{down_forward.1} parent=0 // pred_check
    _
  $region3: #{down_forward.1} parent=0 // pred_check_branch
    %12 = sbr.rel (0) target = $region5
  $region4: #{down_forward.1} parent=0 // pred_region
    _
  $region5: #{down_forward.1} parent=0 // pred_fallthru
    _
  // Predicated region
  $region6: #{down_forward.1} parent=0 // pred_check
    _
  $region7: #{down_forward.1} parent=0 // pred_check_branch
    %14 = sbr.rel (0) target = $region9
  $region8: #{down_forward.1} parent=0 // pred_region
    _
  $region9: #{down_forward.1} parent=0 // pred_fallthru
    _
  // Predicated region
  $region10: #{down_forward.1} parent=0 // pred_check
    _
  $region11: #{down_forward.1} parent=0 // pred_check_branch
    %16 = sbr.rel (0) target = $region13
  $region12: #{down_forward.1} parent=0 // pred_region
    _
  $region13: #{down_forward.1} parent=0 // pred_fallthru
    _
  // Predicated region
  $region14: #{down_forward.1} parent=0 // pred_check
    _
  $region15: #{down_forward.1} parent=0 // pred_check_branch
    %18 = sbr.rel (0) target = $region17
  $region16: #{down_forward.1} parent=0 // pred_region
    _
  $region17: #{down_forward.1} parent=0 // pred_fallthru
    _
  // Predicated region
  $region18: #{down_forward.1} parent=0 // pred_check
    _
  $region19: #{down_forward.1} parent=0 // pred_check_branch
    %20 = sbr.rel (0) target = $region21
  $region20: #{down_forward.1} parent=0 // pred_region
    _
  $region21: #{down_forward.1} parent=0 // pred_fallthru
    _
  // Predicated region
  $region22: #{down_forward.1} parent=0 // pred_check
    _
  $region23: #{down_forward.1} parent=0 // pred_check_branch
    %22 = sbr.rel (0) target = $region25
  $region24: #{down_forward.1} parent=0 // pred_region
    _
  $region25: #{down_forward.1} parent=0 // pred_fallthru
    _
  %v23 = vld [vmem:[%s5] sm:$0xff]
  %v24 = vld [vmem:[%s5 + $0x8] sm:$0x1]
  %v25 = vld [vmem:[%s0] sm:$0xf]
  %v26 = vld [vmem:[%s1] sm:$0xff]
  %v27 = vld [vmem:[%s2] sm:$0xff]
  %29 = vrot.lane.b32.xlu0 %v25, 9
  %v30 = vpop.permute.xlu0 %29
  %v32 = vlaneseq
  %v33 = vshrl.u32 %v32, 7
  %v34 = vsub.s32 0, %v33
  %v35 = vrot.slane %v23, %v34
  %v36 = vmul.f32 %v30, %v35
  %38 = vset.pattern.permute.xlu0 0
  %39 = vperm.xlu0 %38, %v26
  %v40 = vpop.permute.xlu0 %39
  %v42 = vlaneseq
  %v43 = vshrl.u32 %v42, 7
  %v44 = vsub.s32 0, %v43
  %v45 = vrot.slane %v36, %v44
  %v46 = vmul.f32 %v40, %v45
  %v47 = vadd.f32 %v46, 0.0
  %48 = vset.pattern.permute.xlu0 1
  %49 = vperm.xlu0 %48, %v26
  %v50 = vpop.permute.xlu0 %49
  %v52 = vlaneseq
  %v53 = vshrl.u32 %v52, 7
  %v54 = vsub.s32 1, %v53
  %v55 = vrot.slane %v36, %v54
  %v56 = vmul.f32 %v50, %v55
  %v57 = vadd.f32 %v47, %v56
  %58 = vset.pattern.permute.xlu0 2
  %59 = vperm.xlu0 %58, %v26
  %v60 = vpop.permute.xlu0 %59
  %v62 = vlaneseq
  %v63 = vshrl.u32 %v62, 7
  %v64 = vsub.s32 2, %v63
  %v65 = vrot.slane %v36, %v64
  %v66 = vmul.f32 %v60, %v65
  %v67 = vadd.f32 %v57, %v66
  %68 = vset.pattern.permute.xlu0 3
  %69 = vperm.xlu0 %68, %v26
  %v70 = vpop.permute.xlu0 %69
  %v72 = vlaneseq
  %v73 = vshrl.u32 %v72, 7
  %v74 = vsub.s32 3, %v73
  %v75 = vrot.slane %v36, %v74
  %v76 = vmul.f32 %v70, %v75
  %v77 = vadd.f32 %v67, %v76
  %78 = vrot.lane.b32.xlu0 %v25, 8
  %v79 = vpop.permute.xlu0 %78
  %v81 = vlaneseq
  %v82 = vshrl.u32 %v81, 7
  %v83 = vsub.s32 1, %v82
  %v84 = vrot.slane %v23, %v83
  %v85 = vmul.f32 %v79, %v84
  %86 = vset.pattern.permute.xlu0 4
  %87 = vperm.xlu0 %86, %v26
  %v88 = vpop.permute.xlu0 %87
  %v90 = vlaneseq
  %v91 = vshrl.u32 %v90, 7
  %v92 = vsub.s32 0, %v91
  %v93 = vrot.slane %v85, %v92
  %v94 = vmul.f32 %v88, %v93
  %v95 = vadd.f32 %v77, %v94
  %96 = vset.pattern.permute.xlu0 5
  %97 = vperm.xlu0 %96, %v26
  %v98 = vpop.permute.xlu0 %97
  %v100 = vlaneseq
  %v101 = vshrl.u32 %v100, 7
  %v102 = vsub.s32 1, %v101
  %v103 = vrot.slane %v85, %v102
  %v104 = vmul.f32 %v98, %v103
  %v105 = vadd.f32 %v95, %v104
  %106 = vset.pattern.permute.xlu0 6
  %107 = vperm.xlu0 %106, %v26
  %v108 = vpop.permute.xlu0 %107
  %v110 = vlaneseq
  %v111 = vshrl.u32 %v110, 7
  %v112 = vsub.s32 2, %v111
  %v113 = vrot.slane %v85, %v112
  %v114 = vmul.f32 %v108, %v113
  %v115 = vadd.f32 %v105, %v114
  %116 = vset.pattern.permute.xlu0 7
  %117 = vperm.xlu0 %116, %v26
  %v118 = vpop.permute.xlu0 %117
  %v120 = vlaneseq
  %v121 = vshrl.u32 %v120, 7
  %v122 = vsub.s32 3, %v121
  %v123 = vrot.slane %v85, %v122
  %v124 = vmul.f32 %v118, %v123
  %v125 = vadd.f32 %v115, %v124
  %126 = vrot.lane.b32.xlu0 %v25, 7
  %v127 = vpop.permute.xlu0 %126
  %v129 = vlaneseq
  %v130 = vshrl.u32 %v129, 7
  %v131 = vsub.s32 2, %v130
  %v132 = vrot.slane %v23, %v131
  %v133 = vmul.f32 %v127, %v132
  %134 = vset.pattern.permute.xlu0 8
  %135 = vperm.xlu0 %134, %v26
  %v136 = vpop.permute.xlu0 %135
  %v138 = vlaneseq
  %v139 = vshrl.u32 %v138, 7
  %v140 = vsub.s32 0, %v139
  %v141 = vrot.slane %v133, %v140
  %v142 = vmul.f32 %v136, %v141
  %v143 = vadd.f32 %v125, %v142
  %144 = vset.pattern.permute.xlu0 9
  %145 = vperm.xlu0 %144, %v26
  %v146 = vpop.permute.xlu0 %145
  %v148 = vlaneseq
  %v149 = vshrl.u32 %v148, 7
  %v150 = vsub.s32 1, %v149
  %v151 = vrot.slane %v133, %v150
  %v152 = vmul.f32 %v146, %v151
  %v153 = vadd.f32 %v143, %v152
  %154 = vset.pattern.permute.xlu0 10
  %155 = vperm.xlu0 %154, %v26
  %v156 = vpop.permute.xlu0 %155
  %v158 = vlaneseq
  %v159 = vshrl.u32 %v158, 7
  %v160 = vsub.s32 2, %v159
  %v161 = vrot.slane %v133, %v160
  %v162 = vmul.f32 %v156, %v161
  %v163 = vadd.f32 %v153, %v162
  %164 = vset.pattern.permute.xlu0 11
  %165 = vperm.xlu0 %164, %v26
  %v166 = vpop.permute.xlu0 %165
  %v168 = vlaneseq
  %v169 = vshrl.u32 %v168, 7
  %v170 = vsub.s32 3, %v169
  %v171 = vrot.slane %v133, %v170
  %v172 = vmul.f32 %v166, %v171
  %v173 = vadd.f32 %v163, %v172
  %174 = vrot.lane.b32.xlu0 %v25, 1
  %v175 = vpop.permute.xlu0 %174
  %v177 = vlaneseq
  %v178 = vshrl.u32 %v177, 7
  %v179 = vsub.s32 3, %v178
  %v180 = vrot.slane %v23, %v179
  %v181 = vmul.f32 %v175, %v180
  %182 = vset.pattern.permute.xlu0 12
  %183 = vperm.xlu0 %182, %v26
  %v184 = vpop.permute.xlu0 %183
  %v186 = vlaneseq
  %v187 = vshrl.u32 %v186, 7
  %v188 = vsub.s32 0, %v187
  %v189 = vrot.slane %v181, %v188
  %v190 = vmul.f32 %v184, %v189
  %v191 = vadd.f32 %v173, %v190
  %192 = vset.pattern.permute.xlu0 13
  %193 = vperm.xlu0 %192, %v26
  %v194 = vpop.permute.xlu0 %193
  %v196 = vlaneseq
  %v197 = vshrl.u32 %v196, 7
  %v198 = vsub.s32 1, %v197
  %v199 = vrot.slane %v181, %v198
  %v200 = vmul.f32 %v194, %v199
  %v201 = vadd.f32 %v191, %v200
  %202 = vset.pattern.permute.xlu0 14
  %203 = vperm.xlu0 %202, %v26
  %v204 = vpop.permute.xlu0 %203
  %v206 = vlaneseq
  %v207 = vshrl.u32 %v206, 7
  %v208 = vsub.s32 2, %v207
  %v209 = vrot.slane %v181, %v208
  %v210 = vmul.f32 %v204, %v209
  %v211 = vadd.f32 %v201, %v210
  %212 = vset.pattern.permute.xlu0 15
  %213 = vperm.xlu0 %212, %v26
  %v214 = vpop.permute.xlu0 %213
  %v216 = vlaneseq
  %v217 = vshrl.u32 %v216, 7
  %v218 = vsub.s32 3, %v217
  %v219 = vrot.slane %v181, %v218
  %v220 = vmul.f32 %v214, %v219
  %v221 = vadd.f32 %v211, %v220
  %222 = vset.pattern.permute.xlu0 16
  %223 = vperm.xlu0 %222, %v26
  %v224 = vpop.permute.xlu0 %223
  %v226 = vlaneseq
  %v227 = vshrl.u32 %v226, 7
  %v228 = vsub.s32 0, %v227
  %v229 = vrot.slane %v25, %v228
  %v230 = vmul.f32 %v224, %v229
  %v231 = vadd.f32 %v221, %v230
  %232 = vset.pattern.permute.xlu0 17
  %233 = vperm.xlu0 %232, %v26
  %v234 = vpop.permute.xlu0 %233
  %v236 = vlaneseq
  %v237 = vshrl.u32 %v236, 7
  %v238 = vsub.s32 1, %v237
  %v239 = vrot.slane %v25, %v238
  %v240 = vmul.f32 %v234, %v239
  %v241 = vadd.f32 %v231, %v240
  %242 = vset.pattern.permute.xlu0 18
  %243 = vperm.xlu0 %242, %v26
  %v244 = vpop.permute.xlu0 %243
  %v246 = vlaneseq
  %v247 = vshrl.u32 %v246, 7
  %v248 = vsub.s32 2, %v247
  %v249 = vrot.slane %v25, %v248
  %v250 = vmul.f32 %v244, %v249
  %v251 = vadd.f32 %v241, %v250
  %252 = vset.pattern.permute.xlu0 19
  %253 = vperm.xlu0 %252, %v26
  %v254 = vpop.permute.xlu0 %253
  %v256 = vlaneseq
  %v257 = vshrl.u32 %v256, 7
  %v258 = vsub.s32 3, %v257
  %v259 = vrot.slane %v25, %v258
  %v260 = vmul.f32 %v254, %v259
  %v261 = vadd.f32 %v251, %v260
  %262 = vrot.lane.b32.xlu0 %v25, 127
  %v263 = vpop.permute.xlu0 %262
  %v265 = vlaneseq
  %v266 = vshrl.u32 %v265, 7
  %v267 = vsub.s32 5, %v266
  %v268 = vrot.slane %v23, %v267
  %v269 = vmul.f32 %v263, %v268
  %270 = vset.pattern.permute.xlu0 20
  %271 = vperm.xlu0 %270, %v26
  %v272 = vpop.permute.xlu0 %271
  %v274 = vlaneseq
  %v275 = vshrl.u32 %v274, 7
  %v276 = vsub.s32 0, %v275
  %v277 = vrot.slane %v269, %v276
  %v278 = vmul.f32 %v272, %v277
  %v279 = vadd.f32 %v261, %v278
  %280 = vset.pattern.permute.xlu0 21
  %281 = vperm.xlu0 %280, %v26
  %v282 = vpop.permute.xlu0 %281
  %v284 = vlaneseq
  %v285 = vshrl.u32 %v284, 7
  %v286 = vsub.s32 1, %v285
  %v287 = vrot.slane %v269, %v286
  %v288 = vmul.f32 %v282, %v287
  %v289 = vadd.f32 %v279, %v288
  %290 = vset.pattern.permute.xlu0 22
  %291 = vperm.xlu0 %290, %v26
  %v292 = vpop.permute.xlu0 %291
  %v294 = vlaneseq
  %v295 = vshrl.u32 %v294, 7
  %v296 = vsub.s32 2, %v295
  %v297 = vrot.slane %v269, %v296
  %v298 = vmul.f32 %v292, %v297
  %v299 = vadd.f32 %v289, %v298
  %300 = vset.pattern.permute.xlu0 23
  %301 = vperm.xlu0 %300, %v26
  %v302 = vpop.permute.xlu0 %301
  %v304 = vlaneseq
  %v305 = vshrl.u32 %v304, 7
  %v306 = vsub.s32 3, %v305
  %v307 = vrot.slane %v269, %v306
  %v308 = vmul.f32 %v302, %v307
  %v309 = vadd.f32 %v299, %v308
  %310 = vrot.lane.b32.xlu0 %v25, 121
  %v311 = vpop.permute.xlu0 %310
  %v313 = vlaneseq
  %v314 = vshrl.u32 %v313, 7
  %v315 = vsub.s32 6, %v314
  %v316 = vrot.slane %v23, %v315
  %v317 = vmul.f32 %v311, %v316
  %318 = vset.pattern.permute.xlu0 24
  %319 = vperm.xlu0 %318, %v26
  %v320 = vpop.permute.xlu0 %319
  %v322 = vlaneseq
  %v323 = vshrl.u32 %v322, 7
  %v324 = vsub.s32 0, %v323
  %v325 = vrot.slane %v317, %v324
  %v326 = vmul.f32 %v320, %v325
  %v327 = vadd.f32 %v309, %v326
  %328 = vset.pattern.permute.xlu0 25
  %329 = vperm.xlu0 %328, %v26
  %v330 = vpop.permute.xlu0 %329
  %v332 = vlaneseq
  %v333 = vshrl.u32 %v332, 7
  %v334 = vsub.s32 1, %v333
  %v335 = vrot.slane %v317, %v334
  %v336 = vmul.f32 %v330, %v335
  %v337 = vadd.f32 %v327, %v336
  %338 = vset.pattern.permute.xlu0 26
  %339 = vperm.xlu0 %338, %v26
  %v340 = vpop.permute.xlu0 %339
  %v342 = vlaneseq
  %v343 = vshrl.u32 %v342, 7
  %v344 = vsub.s32 2, %v343
  %v345 = vrot.slane %v317, %v344
  %v346 = vmul.f32 %v340, %v345
  %v347 = vadd.f32 %v337, %v346
  %348 = vset.pattern.permute.xlu0 27
  %349 = vperm.xlu0 %348, %v26
  %v350 = vpop.permute.xlu0 %349
  %v352 = vlaneseq
  %v353 = vshrl.u32 %v352, 7
  %v354 = vsub.s32 3, %v353
  %v355 = vrot.slane %v317, %v354
  %v356 = vmul.f32 %v350, %v355
  %v357 = vadd.f32 %v347, %v356
  %358 = vrot.lane.b32.xlu0 %v25, 120
  %v359 = vpop.permute.xlu0 %358
  %v361 = vlaneseq
  %v362 = vshrl.u32 %v361, 7
  %v363 = vsub.s32 7, %v362
  %v364 = vrot.slane %v23, %v363
  %v365 = vmul.f32 %v359, %v364
  %366 = vset.pattern.permute.xlu0 28
  %367 = vperm.xlu0 %366, %v26
  %v368 = vpop.permute.xlu0 %367
  %v370 = vlaneseq
  %v371 = vshrl.u32 %v370, 7
  %v372 = vsub.s32 0, %v371
  %v373 = vrot.slane %v365, %v372
  %v374 = vmul.f32 %v368, %v373
  %v375 = vadd.f32 %v357, %v374
  %376 = vset.pattern.permute.xlu0 29
  %377 = vperm.xlu0 %376, %v26
  %v378 = vpop.permute.xlu0 %377
  %v380 = vlaneseq
  %v381 = vshrl.u32 %v380, 7
  %v382 = vsub.s32 1, %v381
  %v383 = vrot.slane %v365, %v382
  %v384 = vmul.f32 %v378, %v383
  %v385 = vadd.f32 %v375, %v384
  %386 = vset.pattern.permute.xlu0 30
  %387 = vperm.xlu0 %386, %v26
  %v388 = vpop.permute.xlu0 %387
  %v390 = vlaneseq
  %v391 = vshrl.u32 %v390, 7
  %v392 = vsub.s32 2, %v391
  %v393 = vrot.slane %v365, %v392
  %v394 = vmul.f32 %v388, %v393
  %v395 = vadd.f32 %v385, %v394
  %396 = vset.pattern.permute.xlu0 31
  %397 = vperm.xlu0 %396, %v26
  %v398 = vpop.permute.xlu0 %397
  %v400 = vlaneseq
  %v401 = vshrl.u32 %v400, 7
  %v402 = vsub.s32 3, %v401
  %v403 = vrot.slane %v365, %v402
  %v404 = vmul.f32 %v398, %v403
  %v405 = vadd.f32 %v395, %v404
  %406 = vrot.lane.b32.xlu0 %v25, 119
  %v407 = vpop.permute.xlu0 %406
  %v409 = vlaneseq
  %v410 = vshrl.u32 %v409, 7
  %v411 = vsub.s32 0, %v410
  %v412 = vrot.slane %v24, %v411
  %v413 = vmul.f32 %v407, %v412
  %414 = vset.pattern.permute.xlu0 32
  %415 = vperm.xlu0 %414, %v26
  %v416 = vpop.permute.xlu0 %415
  %v418 = vlaneseq
  %v419 = vshrl.u32 %v418, 7
  %v420 = vsub.s32 0, %v419
  %v421 = vrot.slane %v413, %v420
  %v422 = vmul.f32 %v416, %v421
  %v423 = vadd.f32 %v405, %v422
  %424 = vset.pattern.permute.xlu0 33
  %425 = vperm.xlu0 %424, %v26
  %v426 = vpop.permute.xlu0 %425
  %v428 = vlaneseq
  %v429 = vshrl.u32 %v428, 7
  %v430 = vsub.s32 1, %v429
  %v431 = vrot.slane %v413, %v430
  %v432 = vmul.f32 %v426, %v431
  %v433 = vadd.f32 %v423, %v432
  %434 = vset.pattern.permute.xlu0 34
  %435 = vperm.xlu0 %434, %v26
  %v436 = vpop.permute.xlu0 %435
  %v438 = vlaneseq
  %v439 = vshrl.u32 %v438, 7
  %v440 = vsub.s32 2, %v439
  %v441 = vrot.slane %v413, %v440
  %v442 = vmul.f32 %v436, %v441
  %v443 = vadd.f32 %v433, %v442
  %444 = vset.pattern.permute.xlu0 35
  %445 = vperm.xlu0 %444, %v26
  %v446 = vpop.permute.xlu0 %445
  %v448 = vlaneseq
  %v449 = vshrl.u32 %v448, 7
  %v450 = vsub.s32 3, %v449
  %v451 = vrot.slane %v413, %v450
  %v452 = vmul.f32 %v446, %v451
  %v453 = vadd.f32 %v443, %v452
  %455 = vset.pattern.permute.xlu0 0
  %456 = vperm.xlu0 %455, %v27
  %v457 = vpop.permute.xlu0 %456
  %v459 = vadd.f32 %v453, %v457
  %v460 = vmax.f32 %v459, 0.0
  %v461 = vld [vmem:[%s3] sm:$0xff]
  %v462 = vld [vmem:[%s4] sm:$0xff]
  %464 = vrot.lane.b32.xlu0 %v460, 9
  %v465 = vpop.permute.xlu0 %464
  %v467 = vmul.f32 %v465, %v35
  %469 = vset.pattern.permute.xlu0 0
  %470 = vperm.xlu0 %469, %v461
  %v471 = vpop.permute.xlu0 %470
  %v473 = vlaneseq
  %v474 = vshrl.u32 %v473, 7
  %v475 = vsub.s32 0, %v474
  %v476 = vrot.slane %v467, %v475
  %v477 = vmul.f32 %v471, %v476
  %v478 = vadd.f32 %v477, 0.0
  %479 = vset.pattern.permute.xlu0 1
  %480 = vperm.xlu0 %479, %v461
  %v481 = vpop.permute.xlu0 %480
  %v483 = vlaneseq
  %v484 = vshrl.u32 %v483, 7
  %v485 = vsub.s32 1, %v484
  %v486 = vrot.slane %v467, %v485
  %v487 = vmul.f32 %v481, %v486
  %v488 = vadd.f32 %v478, %v487
  %489 = vset.pattern.permute.xlu0 2
  %490 = vperm.xlu0 %489, %v461
  %v491 = vpop.permute.xlu0 %490
  %v493 = vlaneseq
  %v494 = vshrl.u32 %v493, 7
  %v495 = vsub.s32 2, %v494
  %v496 = vrot.slane %v467, %v495
  %v497 = vmul.f32 %v491, %v496
  %v498 = vadd.f32 %v488, %v497
  %499 = vset.pattern.permute.xlu0 3
  %500 = vperm.xlu0 %499, %v461
  %v501 = vpop.permute.xlu0 %500
  %v503 = vlaneseq
  %v504 = vshrl.u32 %v503, 7
  %v505 = vsub.s32 3, %v504
  %v506 = vrot.slane %v467, %v505
  %v507 = vmul.f32 %v501, %v506
  %v508 = vadd.f32 %v498, %v507
  %509 = vset.pattern.permute.xlu0 4
  %510 = vperm.xlu0 %509, %v461
  %v511 = vpop.permute.xlu0 %510
  %v513 = vlaneseq
  %v514 = vshrl.u32 %v513, 7
  %v515 = vsub.s32 4, %v514
  %v516 = vrot.slane %v467, %v515
  %v517 = vmul.f32 %v511, %v516
  %v518 = vadd.f32 %v508, %v517
  %519 = vset.pattern.permute.xlu0 5
  %520 = vperm.xlu0 %519, %v461
  %v521 = vpop.permute.xlu0 %520
  %v523 = vlaneseq
  %v524 = vshrl.u32 %v523, 7
  %v525 = vsub.s32 5, %v524
  %v526 = vrot.slane %v467, %v525
  %v527 = vmul.f32 %v521, %v526
  %v528 = vadd.f32 %v518, %v527
  %529 = vset.pattern.permute.xlu0 6
  %530 = vperm.xlu0 %529, %v461
  %v531 = vpop.permute.xlu0 %530
  %v533 = vlaneseq
  %v534 = vshrl.u32 %v533, 7
  %v535 = vsub.s32 6, %v534
  %v536 = vrot.slane %v467, %v535
  %v537 = vmul.f32 %v531, %v536
  %v538 = vadd.f32 %v528, %v537
  %539 = vset.pattern.permute.xlu0 7
  %540 = vperm.xlu0 %539, %v461
  %v541 = vpop.permute.xlu0 %540
  %v543 = vlaneseq
  %v544 = vshrl.u32 %v543, 7
  %v545 = vsub.s32 7, %v544
  %v546 = vrot.slane %v467, %v545
  %v547 = vmul.f32 %v541, %v546
  %v548 = vadd.f32 %v538, %v547
  %549 = vrot.lane.b32.xlu0 %v460, 8
  %v550 = vpop.permute.xlu0 %549
  %v552 = vmul.f32 %v550, %v84
  %553 = vset.pattern.permute.xlu0 8
  %554 = vperm.xlu0 %553, %v461
  %v555 = vpop.permute.xlu0 %554
  %v557 = vlaneseq
  %v558 = vshrl.u32 %v557, 7
  %v559 = vsub.s32 0, %v558
  %v560 = vrot.slane %v552, %v559
  %v561 = vmul.f32 %v555, %v560
  %v562 = vadd.f32 %v548, %v561
  %563 = vset.pattern.permute.xlu0 9
  %564 = vperm.xlu0 %563, %v461
  %v565 = vpop.permute.xlu0 %564
  %v567 = vlaneseq
  %v568 = vshrl.u32 %v567, 7
  %v569 = vsub.s32 1, %v568
  %v570 = vrot.slane %v552, %v569
  %v571 = vmul.f32 %v565, %v570
  %v572 = vadd.f32 %v562, %v571
  %573 = vset.pattern.permute.xlu0 10
  %574 = vperm.xlu0 %573, %v461
  %v575 = vpop.permute.xlu0 %574
  %v577 = vlaneseq
  %v578 = vshrl.u32 %v577, 7
  %v579 = vsub.s32 2, %v578
  %v580 = vrot.slane %v552, %v579
  %v581 = vmul.f32 %v575, %v580
  %v582 = vadd.f32 %v572, %v581
  %583 = vset.pattern.permute.xlu0 11
  %584 = vperm.xlu0 %583, %v461
  %v585 = vpop.permute.xlu0 %584
  %v587 = vlaneseq
  %v588 = vshrl.u32 %v587, 7
  %v589 = vsub.s32 3, %v588
  %v590 = vrot.slane %v552, %v589
  %v591 = vmul.f32 %v585, %v590
  %v592 = vadd.f32 %v582, %v591
  %593 = vset.pattern.permute.xlu0 12
  %594 = vperm.xlu0 %593, %v461
  %v595 = vpop.permute.xlu0 %594
  %v597 = vlaneseq
  %v598 = vshrl.u32 %v597, 7
  %v599 = vsub.s32 4, %v598
  %v600 = vrot.slane %v552, %v599
  %v601 = vmul.f32 %v595, %v600
  %v602 = vadd.f32 %v592, %v601
  %603 = vset.pattern.permute.xlu0 13
  %604 = vperm.xlu0 %603, %v461
  %v605 = vpop.permute.xlu0 %604
  %v607 = vlaneseq
  %v608 = vshrl.u32 %v607, 7
  %v609 = vsub.s32 5, %v608
  %v610 = vrot.slane %v552, %v609
  %v611 = vmul.f32 %v605, %v610
  %v612 = vadd.f32 %v602, %v611
  %613 = vset.pattern.permute.xlu0 14
  %614 = vperm.xlu0 %613, %v461
  %v615 = vpop.permute.xlu0 %614
  %v617 = vlaneseq
  %v618 = vshrl.u32 %v617, 7
  %v619 = vsub.s32 6, %v618
  %v620 = vrot.slane %v552, %v619
  %v621 = vmul.f32 %v615, %v620
  %v622 = vadd.f32 %v612, %v621
  %623 = vset.pattern.permute.xlu0 15
  %624 = vperm.xlu0 %623, %v461
  %v625 = vpop.permute.xlu0 %624
  %v627 = vlaneseq
  %v628 = vshrl.u32 %v627, 7
  %v629 = vsub.s32 7, %v628
  %v630 = vrot.slane %v552, %v629
  %v631 = vmul.f32 %v625, %v630
  %v632 = vadd.f32 %v622, %v631
  %633 = vrot.lane.b32.xlu0 %v460, 7
  %v634 = vpop.permute.xlu0 %633
  %v636 = vmul.f32 %v634, %v132
  %637 = vset.pattern.permute.xlu0 16
  %638 = vperm.xlu0 %637, %v461
  %v639 = vpop.permute.xlu0 %638
  %v641 = vlaneseq
  %v642 = vshrl.u32 %v641, 7
  %v643 = vsub.s32 0, %v642
  %v644 = vrot.slane %v636, %v643
  %v645 = vmul.f32 %v639, %v644
  %v646 = vadd.f32 %v632, %v645
  %647 = vset.pattern.permute.xlu0 17
  %648 = vperm.xlu0 %647, %v461
  %v649 = vpop.permute.xlu0 %648
  %v651 = vlaneseq
  %v652 = vshrl.u32 %v651, 7
  %v653 = vsub.s32 1, %v652
  %v654 = vrot.slane %v636, %v653
  %v655 = vmul.f32 %v649, %v654
  %v656 = vadd.f32 %v646, %v655
  %657 = vset.pattern.permute.xlu0 18
  %658 = vperm.xlu0 %657, %v461
  %v659 = vpop.permute.xlu0 %658
  %v661 = vlaneseq
  %v662 = vshrl.u32 %v661, 7
  %v663 = vsub.s32 2, %v662
  %v664 = vrot.slane %v636, %v663
  %v665 = vmul.f32 %v659, %v664
  %v666 = vadd.f32 %v656, %v665
  %667 = vset.pattern.permute.xlu0 19
  %668 = vperm.xlu0 %667, %v461
  %v669 = vpop.permute.xlu0 %668
  %v671 = vlaneseq
  %v672 = vshrl.u32 %v671, 7
  %v673 = vsub.s32 3, %v672
  %v674 = vrot.slane %v636, %v673
  %v675 = vmul.f32 %v669, %v674
  %v676 = vadd.f32 %v666, %v675
  %677 = vset.pattern.permute.xlu0 20
  %678 = vperm.xlu0 %677, %v461
  %v679 = vpop.permute.xlu0 %678
  %v681 = vlaneseq
  %v682 = vshrl.u32 %v681, 7
  %v683 = vsub.s32 4, %v682
  %v684 = vrot.slane %v636, %v683
  %v685 = vmul.f32 %v679, %v684
  %v686 = vadd.f32 %v676, %v685
  %687 = vset.pattern.permute.xlu0 21
  %688 = vperm.xlu0 %687, %v461
  %v689 = vpop.permute.xlu0 %688
  %v691 = vlaneseq
  %v692 = vshrl.u32 %v691, 7
  %v693 = vsub.s32 5, %v692
  %v694 = vrot.slane %v636, %v693
  %v695 = vmul.f32 %v689, %v694
  %v696 = vadd.f32 %v686, %v695
  %697 = vset.pattern.permute.xlu0 22
  %698 = vperm.xlu0 %697, %v461
  %v699 = vpop.permute.xlu0 %698
  %v701 = vlaneseq
  %v702 = vshrl.u32 %v701, 7
  %v703 = vsub.s32 6, %v702
  %v704 = vrot.slane %v636, %v703
  %v705 = vmul.f32 %v699, %v704
  %v706 = vadd.f32 %v696, %v705
  %707 = vset.pattern.permute.xlu0 23
  %708 = vperm.xlu0 %707, %v461
  %v709 = vpop.permute.xlu0 %708
  %v711 = vlaneseq
  %v712 = vshrl.u32 %v711, 7
  %v713 = vsub.s32 7, %v712
  %v714 = vrot.slane %v636, %v713
  %v715 = vmul.f32 %v709, %v714
  %v716 = vadd.f32 %v706, %v715
  %717 = vrot.lane.b32.xlu0 %v460, 1
  %v718 = vpop.permute.xlu0 %717
  %v720 = vmul.f32 %v718, %v180
  %721 = vset.pattern.permute.xlu0 24
  %722 = vperm.xlu0 %721, %v461
  %v723 = vpop.permute.xlu0 %722
  %v725 = vlaneseq
  %v726 = vshrl.u32 %v725, 7
  %v727 = vsub.s32 0, %v726
  %v728 = vrot.slane %v720, %v727
  %v729 = vmul.f32 %v723, %v728
  %v730 = vadd.f32 %v716, %v729
  %731 = vset.pattern.permute.xlu0 25
  %732 = vperm.xlu0 %731, %v461
  %v733 = vpop.permute.xlu0 %732
  %v735 = vlaneseq
  %v736 = vshrl.u32 %v735, 7
  %v737 = vsub.s32 1, %v736
  %v738 = vrot.slane %v720, %v737
  %v739 = vmul.f32 %v733, %v738
  %v740 = vadd.f32 %v730, %v739
  %741 = vset.pattern.permute.xlu0 26
  %742 = vperm.xlu0 %741, %v461
  %v743 = vpop.permute.xlu0 %742
  %v745 = vlaneseq
  %v746 = vshrl.u32 %v745, 7
  %v747 = vsub.s32 2, %v746
  %v748 = vrot.slane %v720, %v747
  %v749 = vmul.f32 %v743, %v748
  %v750 = vadd.f32 %v740, %v749
  %751 = vset.pattern.permute.xlu0 27
  %752 = vperm.xlu0 %751, %v461
  %v753 = vpop.permute.xlu0 %752
  %v755 = vlaneseq
  %v756 = vshrl.u32 %v755, 7
  %v757 = vsub.s32 3, %v756
  %v758 = vrot.slane %v720, %v757
  %v759 = vmul.f32 %v753, %v758
  %v760 = vadd.f32 %v750, %v759
  %761 = vset.pattern.permute.xlu0 28
  %762 = vperm.xlu0 %761, %v461
  %v763 = vpop.permute.xlu0 %762
  %v765 = vlaneseq
  %v766 = vshrl.u32 %v765, 7
  %v767 = vsub.s32 4, %v766
  %v768 = vrot.slane %v720, %v767
  %v769 = vmul.f32 %v763, %v768
  %v770 = vadd.f32 %v760, %v769
  %771 = vset.pattern.permute.xlu0 29
  %772 = vperm.xlu0 %771, %v461
  %v773 = vpop.permute.xlu0 %772
  %v775 = vlaneseq
  %v776 = vshrl.u32 %v775, 7
  %v777 = vsub.s32 5, %v776
  %v778 = vrot.slane %v720, %v777
  %v779 = vmul.f32 %v773, %v778
  %v780 = vadd.f32 %v770, %v779
  %781 = vset.pattern.permute.xlu0 30
  %782 = vperm.xlu0 %781, %v461
  %v783 = vpop.permute.xlu0 %782
  %v785 = vlaneseq
  %v786 = vshrl.u32 %v785, 7
  %v787 = vsub.s32 6, %v786
  %v788 = vrot.slane %v720, %v787
  %v789 = vmul.f32 %v783, %v788
  %v790 = vadd.f32 %v780, %v789
  %791 = vset.pattern.permute.xlu0 31
  %792 = vperm.xlu0 %791, %v461
  %v793 = vpop.permute.xlu0 %792
  %v795 = vlaneseq
  %v796 = vshrl.u32 %v795, 7
  %v797 = vsub.s32 7, %v796
  %v798 = vrot.slane %v720, %v797
  %v799 = vmul.f32 %v793, %v798
  %v800 = vadd.f32 %v790, %v799
  %801 = vset.pattern.permute.xlu0 32
  %802 = vperm.xlu0 %801, %v461
  %v803 = vpop.permute.xlu0 %802
  %v805 = vlaneseq
  %v806 = vshrl.u32 %v805, 7
  %v807 = vsub.s32 0, %v806
  %v808 = vrot.slane %v460, %v807
  %v809 = vmul.f32 %v803, %v808
  %v810 = vadd.f32 %v800, %v809
  %811 = vset.pattern.permute.xlu0 33
  %812 = vperm.xlu0 %811, %v461
  %v813 = vpop.permute.xlu0 %812
  %v815 = vlaneseq
  %v816 = vshrl.u32 %v815, 7
  %v817 = vsub.s32 1, %v816
  %v818 = vrot.slane %v460, %v817
  %v819 = vmul.f32 %v813, %v818
  %v820 = vadd.f32 %v810, %v819
  %821 = vset.pattern.permute.xlu0 34
  %822 = vperm.xlu0 %821, %v461
  %v823 = vpop.permute.xlu0 %822
  %v825 = vlaneseq
  %v826 = vshrl.u32 %v825, 7
  %v827 = vsub.s32 2, %v826
  %v828 = vrot.slane %v460, %v827
  %v829 = vmul.f32 %v823, %v828
  %v830 = vadd.f32 %v820, %v829
  %831 = vset.pattern.permute.xlu0 35
  %832 = vperm.xlu0 %831, %v461
  %v833 = vpop.permute.xlu0 %832
  %v835 = vlaneseq
  %v836 = vshrl.u32 %v835, 7
  %v837 = vsub.s32 3, %v836
  %v838 = vrot.slane %v460, %v837
  %v839 = vmul.f32 %v833, %v838
  %v840 = vadd.f32 %v830, %v839
  %841 = vset.pattern.permute.xlu0 36
  %842 = vperm.xlu0 %841, %v461
  %v843 = vpop.permute.xlu0 %842
  %v845 = vlaneseq
  %v846 = vshrl.u32 %v845, 7
  %v847 = vsub.s32 4, %v846
  %v848 = vrot.slane %v460, %v847
  %v849 = vmul.f32 %v843, %v848
  %v850 = vadd.f32 %v840, %v849
  %851 = vset.pattern.permute.xlu0 37
  %852 = vperm.xlu0 %851, %v461
  %v853 = vpop.permute.xlu0 %852
  %v855 = vlaneseq
  %v856 = vshrl.u32 %v855, 7
  %v857 = vsub.s32 5, %v856
  %v858 = vrot.slane %v460, %v857
  %v859 = vmul.f32 %v853, %v858
  %v860 = vadd.f32 %v850, %v859
  %861 = vset.pattern.permute.xlu0 38
  %862 = vperm.xlu0 %861, %v461
  %v863 = vpop.permute.xlu0 %862
  %v865 = vlaneseq
  %v866 = vshrl.u32 %v865, 7
  %v867 = vsub.s32 6, %v866
  %v868 = vrot.slane %v460, %v867
  %v869 = vmul.f32 %v863, %v868
  %v870 = vadd.f32 %v860, %v869
  %871 = vset.pattern.permute.xlu0 39
  %872 = vperm.xlu0 %871, %v461
  %v873 = vpop.permute.xlu0 %872
  %v875 = vlaneseq
  %v876 = vshrl.u32 %v875, 7
  %v877 = vsub.s32 7, %v876
  %v878 = vrot.slane %v460, %v877
  %v879 = vmul.f32 %v873, %v878
  %v880 = vadd.f32 %v870, %v879
  %881 = vrot.lane.b32.xlu0 %v460, 127
  %v882 = vpop.permute.xlu0 %881
  %v884 = vmul.f32 %v882, %v268
  %885 = vset.pattern.permute.xlu0 40
  %886 = vperm.xlu0 %885, %v461
  %v887 = vpop.permute.xlu0 %886
  %v889 = vlaneseq
  %v890 = vshrl.u32 %v889, 7
  %v891 = vsub.s32 0, %v890
  %v892 = vrot.slane %v884, %v891
  %v893 = vmul.f32 %v887, %v892
  %v894 = vadd.f32 %v880, %v893
  %895 = vset.pattern.permute.xlu0 41
  %896 = vperm.xlu0 %895, %v461
  %v897 = vpop.permute.xlu0 %896
  %v899 = vlaneseq
  %v900 = vshrl.u32 %v899, 7
  %v901 = vsub.s32 1, %v900
  %v902 = vrot.slane %v884, %v901
  %v903 = vmul.f32 %v897, %v902
  %v904 = vadd.f32 %v894, %v903
  %905 = vset.pattern.permute.xlu0 42
  %906 = vperm.xlu0 %905, %v461
  %v907 = vpop.permute.xlu0 %906
  %v909 = vlaneseq
  %v910 = vshrl.u32 %v909, 7
  %v911 = vsub.s32 2, %v910
  %v912 = vrot.slane %v884, %v911
  %v913 = vmul.f32 %v907, %v912
  %v914 = vadd.f32 %v904, %v913
  %915 = vset.pattern.permute.xlu0 43
  %916 = vperm.xlu0 %915, %v461
  %v917 = vpop.permute.xlu0 %916
  %v919 = vlaneseq
  %v920 = vshrl.u32 %v919, 7
  %v921 = vsub.s32 3, %v920
  %v922 = vrot.slane %v884, %v921
  %v923 = vmul.f32 %v917, %v922
  %v924 = vadd.f32 %v914, %v923
  %925 = vset.pattern.permute.xlu0 44
  %926 = vperm.xlu0 %925, %v461
  %v927 = vpop.permute.xlu0 %926
  %v929 = vlaneseq
  %v930 = vshrl.u32 %v929, 7
  %v931 = vsub.s32 4, %v930
  %v932 = vrot.slane %v884, %v931
  %v933 = vmul.f32 %v927, %v932
  %v934 = vadd.f32 %v924, %v933
  %935 = vset.pattern.permute.xlu0 45
  %936 = vperm.xlu0 %935, %v461
  %v937 = vpop.permute.xlu0 %936
  %v939 = vlaneseq
  %v940 = vshrl.u32 %v939, 7
  %v941 = vsub.s32 5, %v940
  %v942 = vrot.slane %v884, %v941
  %v943 = vmul.f32 %v937, %v942
  %v944 = vadd.f32 %v934, %v943
  %945 = vset.pattern.permute.xlu0 46
  %946 = vperm.xlu0 %945, %v461
  %v947 = vpop.permute.xlu0 %946
  %v949 = vlaneseq
  %v950 = vshrl.u32 %v949, 7
  %v951 = vsub.s32 6, %v950
  %v952 = vrot.slane %v884, %v951
  %v953 = vmul.f32 %v947, %v952
  %v954 = vadd.f32 %v944, %v953
  %955 = vset.pattern.permute.xlu0 47
  %956 = vperm.xlu0 %955, %v461
  %v957 = vpop.permute.xlu0 %956
  %v959 = vlaneseq
  %v960 = vshrl.u32 %v959, 7
  %v961 = vsub.s32 7, %v960
  %v962 = vrot.slane %v884, %v961
  %v963 = vmul.f32 %v957, %v962
  %v964 = vadd.f32 %v954, %v963
  %965 = vrot.lane.b32.xlu0 %v460, 121
  %v966 = vpop.permute.xlu0 %965
  %v968 = vmul.f32 %v966, %v316
  %969 = vset.pattern.permute.xlu0 48
  %970 = vperm.xlu0 %969, %v461
  %v971 = vpop.permute.xlu0 %970
  %v973 = vlaneseq
  %v974 = vshrl.u32 %v973, 7
  %v975 = vsub.s32 0, %v974
  %v976 = vrot.slane %v968, %v975
  %v977 = vmul.f32 %v971, %v976
  %v978 = vadd.f32 %v964, %v977
  %979 = vset.pattern.permute.xlu0 49
  %980 = vperm.xlu0 %979, %v461
  %v981 = vpop.permute.xlu0 %980
  %v983 = vlaneseq
  %v984 = vshrl.u32 %v983, 7
  %v985 = vsub.s32 1, %v984
  %v986 = vrot.slane %v968, %v985
  %v987 = vmul.f32 %v981, %v986
  %v988 = vadd.f32 %v978, %v987
  %989 = vset.pattern.permute.xlu0 50
  %990 = vperm.xlu0 %989, %v461
  %v991 = vpop.permute.xlu0 %990
  %v993 = vlaneseq
  %v994 = vshrl.u32 %v993, 7
  %v995 = vsub.s32 2, %v994
  %v996 = vrot.slane %v968, %v995
  %v997 = vmul.f32 %v991, %v996
  %v998 = vadd.f32 %v988, %v997
  %999 = vset.pattern.permute.xlu0 51
  %1000 = vperm.xlu0 %999, %v461
  %v1001 = vpop.permute.xlu0 %1000
  %v1003 = vlaneseq
  %v1004 = vshrl.u32 %v1003, 7
  %v1005 = vsub.s32 3, %v1004
  %v1006 = vrot.slane %v968, %v1005
  %v1007 = vmul.f32 %v1001, %v1006
  %v1008 = vadd.f32 %v998, %v1007
  %1009 = vset.pattern.permute.xlu0 52
  %1010 = vperm.xlu0 %1009, %v461
  %v1011 = vpop.permute.xlu0 %1010
  %v1013 = vlaneseq
  %v1014 = vshrl.u32 %v1013, 7
  %v1015 = vsub.s32 4, %v1014
  %v1016 = vrot.slane %v968, %v1015
  %v1017 = vmul.f32 %v1011, %v1016
  %v1018 = vadd.f32 %v1008, %v1017
  %1019 = vset.pattern.permute.xlu0 53
  %1020 = vperm.xlu0 %1019, %v461
  %v1021 = vpop.permute.xlu0 %1020
  %v1023 = vlaneseq
  %v1024 = vshrl.u32 %v1023, 7
  %v1025 = vsub.s32 5, %v1024
  %v1026 = vrot.slane %v968, %v1025
  %v1027 = vmul.f32 %v1021, %v1026
  %v1028 = vadd.f32 %v1018, %v1027
  %1029 = vset.pattern.permute.xlu0 54
  %1030 = vperm.xlu0 %1029, %v461
  %v1031 = vpop.permute.xlu0 %1030
  %v1033 = vlaneseq
  %v1034 = vshrl.u32 %v1033, 7
  %v1035 = vsub.s32 6, %v1034
  %v1036 = vrot.slane %v968, %v1035
  %v1037 = vmul.f32 %v1031, %v1036
  %v1038 = vadd.f32 %v1028, %v1037
  %1039 = vset.pattern.permute.xlu0 55
  %1040 = vperm.xlu0 %1039, %v461
  %v1041 = vpop.permute.xlu0 %1040
  %v1043 = vlaneseq
  %v1044 = vshrl.u32 %v1043, 7
  %v1045 = vsub.s32 7, %v1044
  %v1046 = vrot.slane %v968, %v1045
  %v1047 = vmul.f32 %v1041, %v1046
  %v1048 = vadd.f32 %v1038, %v1047
  %1049 = vrot.lane.b32.xlu0 %v460, 120
  %v1050 = vpop.permute.xlu0 %1049
  %v1052 = vmul.f32 %v1050, %v364
  %1053 = vset.pattern.permute.xlu0 56
  %1054 = vperm.xlu0 %1053, %v461
  %v1055 = vpop.permute.xlu0 %1054
  %v1057 = vlaneseq
  %v1058 = vshrl.u32 %v1057, 7
  %v1059 = vsub.s32 0, %v1058
  %v1060 = vrot.slane %v1052, %v1059
  %v1061 = vmul.f32 %v1055, %v1060
  %v1062 = vadd.f32 %v1048, %v1061
  %1063 = vset.pattern.permute.xlu0 57
  %1064 = vperm.xlu0 %1063, %v461
  %v1065 = vpop.permute.xlu0 %1064
  %v1067 = vlaneseq
  %v1068 = vshrl.u32 %v1067, 7
  %v1069 = vsub.s32 1, %v1068
  %v1070 = vrot.slane %v1052, %v1069
  %v1071 = vmul.f32 %v1065, %v1070
  %v1072 = vadd.f32 %v1062, %v1071
  %1073 = vset.pattern.permute.xlu0 58
  %1074 = vperm.xlu0 %1073, %v461
  %v1075 = vpop.permute.xlu0 %1074
  %v1077 = vlaneseq
  %v1078 = vshrl.u32 %v1077, 7
  %v1079 = vsub.s32 2, %v1078
  %v1080 = vrot.slane %v1052, %v1079
  %v1081 = vmul.f32 %v1075, %v1080
  %v1082 = vadd.f32 %v1072, %v1081
  %1083 = vset.pattern.permute.xlu0 59
  %1084 = vperm.xlu0 %1083, %v461
  %v1085 = vpop.permute.xlu0 %1084
  %v1087 = vlaneseq
  %v1088 = vshrl.u32 %v1087, 7
  %v1089 = vsub.s32 3, %v1088
  %v1090 = vrot.slane %v1052, %v1089
  %v1091 = vmul.f32 %v1085, %v1090
  %v1092 = vadd.f32 %v1082, %v1091
  %1093 = vset.pattern.permute.xlu0 60
  %1094 = vperm.xlu0 %1093, %v461
  %v1095 = vpop.permute.xlu0 %1094
  %v1097 = vlaneseq
  %v1098 = vshrl.u32 %v1097, 7
  %v1099 = vsub.s32 4, %v1098
  %v1100 = vrot.slane %v1052, %v1099
  %v1101 = vmul.f32 %v1095, %v1100
  %v1102 = vadd.f32 %v1092, %v1101
  %1103 = vset.pattern.permute.xlu0 61
  %1104 = vperm.xlu0 %1103, %v461
  %v1105 = vpop.permute.xlu0 %1104
  %v1107 = vlaneseq
  %v1108 = vshrl.u32 %v1107, 7
  %v1109 = vsub.s32 5, %v1108
  %v1110 = vrot.slane %v1052, %v1109
  %v1111 = vmul.f32 %v1105, %v1110
  %v1112 = vadd.f32 %v1102, %v1111
  %1113 = vset.pattern.permute.xlu0 62
  %1114 = vperm.xlu0 %1113, %v461
  %v1115 = vpop.permute.xlu0 %1114
  %v1117 = vlaneseq
  %v1118 = vshrl.u32 %v1117, 7
  %v1119 = vsub.s32 6, %v1118
  %v1120 = vrot.slane %v1052, %v1119
  %v1121 = vmul.f32 %v1115, %v1120
  %v1122 = vadd.f32 %v1112, %v1121
  %1123 = vset.pattern.permute.xlu0 63
  %1124 = vperm.xlu0 %1123, %v461
  %v1125 = vpop.permute.xlu0 %1124
  %v1127 = vlaneseq
  %v1128 = vshrl.u32 %v1127, 7
  %v1129 = vsub.s32 7, %v1128
  %v1130 = vrot.slane %v1052, %v1129
  %v1131 = vmul.f32 %v1125, %v1130
  %v1132 = vadd.f32 %v1122, %v1131
  %1133 = vrot.lane.b32.xlu0 %v460, 119
  %v1134 = vpop.permute.xlu0 %1133
  %v1136 = vmul.f32 %v1134, %v412
  %1137 = vset.pattern.permute.xlu0 64
  %1138 = vperm.xlu0 %1137, %v461
  %v1139 = vpop.permute.xlu0 %1138
  %v1141 = vlaneseq
  %v1142 = vshrl.u32 %v1141, 7
  %v1143 = vsub.s32 0, %v1142
  %v1144 = vrot.slane %v1136, %v1143
  %v1145 = vmul.f32 %v1139, %v1144
  %v1146 = vadd.f32 %v1132, %v1145
  %1147 = vset.pattern.permute.xlu0 65
  %1148 = vperm.xlu0 %1147, %v461
  %v1149 = vpop.permute.xlu0 %1148
  %v1151 = vlaneseq
  %v1152 = vshrl.u32 %v1151, 7
  %v1153 = vsub.s32 1, %v1152
  %v1154 = vrot.slane %v1136, %v1153
  %v1155 = vmul.f32 %v1149, %v1154
  %v1156 = vadd.f32 %v1146, %v1155
  %1157 = vset.pattern.permute.xlu0 66
  %1158 = vperm.xlu0 %1157, %v461
  %v1159 = vpop.permute.xlu0 %1158
  %v1161 = vlaneseq
  %v1162 = vshrl.u32 %v1161, 7
  %v1163 = vsub.s32 2, %v1162
  %v1164 = vrot.slane %v1136, %v1163
  %v1165 = vmul.f32 %v1159, %v1164
  %v1166 = vadd.f32 %v1156, %v1165
  %1167 = vset.pattern.permute.xlu0 67
  %1168 = vperm.xlu0 %1167, %v461
  %v1169 = vpop.permute.xlu0 %1168
  %v1171 = vlaneseq
  %v1172 = vshrl.u32 %v1171, 7
  %v1173 = vsub.s32 3, %v1172
  %v1174 = vrot.slane %v1136, %v1173
  %v1175 = vmul.f32 %v1169, %v1174
  %v1176 = vadd.f32 %v1166, %v1175
  %1177 = vset.pattern.permute.xlu0 68
  %1178 = vperm.xlu0 %1177, %v461
  %v1179 = vpop.permute.xlu0 %1178
  %v1181 = vlaneseq
  %v1182 = vshrl.u32 %v1181, 7
  %v1183 = vsub.s32 4, %v1182
  %v1184 = vrot.slane %v1136, %v1183
  %v1185 = vmul.f32 %v1179, %v1184
  %v1186 = vadd.f32 %v1176, %v1185
  %1187 = vset.pattern.permute.xlu0 69
  %1188 = vperm.xlu0 %1187, %v461
  %v1189 = vpop.permute.xlu0 %1188
  %v1191 = vlaneseq
  %v1192 = vshrl.u32 %v1191, 7
  %v1193 = vsub.s32 5, %v1192
  %v1194 = vrot.slane %v1136, %v1193
  %v1195 = vmul.f32 %v1189, %v1194
  %v1196 = vadd.f32 %v1186, %v1195
  %1197 = vset.pattern.permute.xlu0 70
  %1198 = vperm.xlu0 %1197, %v461
  %v1199 = vpop.permute.xlu0 %1198
  %v1201 = vlaneseq
  %v1202 = vshrl.u32 %v1201, 7
  %v1203 = vsub.s32 6, %v1202
  %v1204 = vrot.slane %v1136, %v1203
  %v1205 = vmul.f32 %v1199, %v1204
  %v1206 = vadd.f32 %v1196, %v1205
  %1207 = vset.pattern.permute.xlu0 71
  %1208 = vperm.xlu0 %1207, %v461
  %v1209 = vpop.permute.xlu0 %1208
  %v1211 = vlaneseq
  %v1212 = vshrl.u32 %v1211, 7
  %v1213 = vsub.s32 7, %v1212
  %v1214 = vrot.slane %v1136, %v1213
  %v1215 = vmul.f32 %v1209, %v1214
  %v1216 = vadd.f32 %v1206, %v1215
  %1218 = vset.pattern.permute.xlu0 0
  %1219 = vperm.xlu0 %1218, %v462
  %v1220 = vpop.permute.xlu0 %1219
  %v1222 = vadd.f32 %v1216, %v1220
  %v1223 = vmax.f32 %v1222, 0.0
  %1224 = vst [vmem:[%s6] sm:$0xff] %v1223
  // Predicated region
  $region26: #{down_forward.1} parent=0 // pred_check
    _
  $region27: #{down_forward.1} parent=0 // pred_check_branch
    %1226 = sbr.rel (0) target = $region29
  $region28: #{down_forward.1} parent=0 // pred_region
    _
  $region29: #{down_forward.1} parent=0 // pred_fallthru
    _
  // Predicated region
  $region30: #{down_forward.1} parent=0 // pred_check
    _
  $region31: #{down_forward.1} parent=0 // pred_check_branch
    %1228 = sbr.rel (0) target = $region33
  $region32: #{down_forward.1} parent=0 // pred_region
    _
  $region33: #{down_forward.1} parent=0 // pred_fallthru
    _

</llo_original>
